<compile_context>
chip_gen: v5e
topology: v5e:2x2
jax: 0.10.0
libtpu: 0.0.40
codegen_flags: <defaults>
</compile_context>

<pallas_src>
import jax
import jax.numpy as jnp
from jax.experimental import pallas as pl
from jax.experimental.pallas import tpu as pltpu

D_IN, H1, H2, D_OUT = 2, 16, 10, 1
LANES = 128          # lane width of a vreg
CHUNK = 8            # sublane depth of a vreg -> one dense vreg per feature plane

# Packed parameter layout (flat f32 vector), weights stored (in, out) row-major.
_W1_OFF = 0
_B1_OFF = _W1_OFF + D_IN * H1
_W2_OFF = _B1_OFF + H1
_B2_OFF = _W2_OFF + H1 * H2
_W3_OFF = _B2_OFF + H2
_B3_OFF = _W3_OFF + H2 * D_OUT
N_PARAMS = _B3_OFF + D_OUT  # 229


def mlp_kernel(p_ref, x_ref, o_ref):
    # p_ref: (N_PARAMS,) f32 in SMEM (whole array, resident)
    # x_ref: (D_IN, tile_r, 128) f32 in VMEM
    # o_ref: (D_OUT, tile_r, 128) f32 in VMEM
    # Hoist all scalar parameter reads out of the chunk loop (read once per grid step).
    w1 = [[p_ref[_W1_OFF + k * H1 + j] for j in range(H1)] for k in range(D_IN)]
    b1 = [p_ref[_B1_OFF + j] for j in range(H1)]
    w2 = [[p_ref[_W2_OFF + k * H2 + j] for j in range(H2)] for k in range(H1)]
    b2 = [p_ref[_B2_OFF + j] for j in range(H2)]
    w3 = [p_ref[_W3_OFF + k] for k in range(H2)]
    b3 = p_ref[_B3_OFF]

    tile_r = x_ref.shape[1]
    n_chunks = tile_r // CHUNK  # static python int

    @pl.loop(0, n_chunks)
    def _(c):
        r0 = pl.multiple_of(c * CHUNK, CHUNK)
        # One dense (8, 128) vreg per input feature plane.
        x = [x_ref[k, pl.ds(r0, CHUNK), :] for k in range(D_IN)]

        # Layer 1: 2 -> 16, ReLU  (unrolled scalar*vector FMAs on the VPU)
        h1 = []
        for j in range(H1):
            acc = x[0] * w1[0][j]
            for k in range(1, D_IN):
                acc = acc + x[k] * w1[k][j]
            h1.append(jnp.maximum(acc + b1[j], 0.0))

        # Layer 2: 16 -> 10, ReLU
        h2 = []
        for j in range(H2):
            acc = h1[0] * w2[0][j]
            for k in range(1, H1):
                acc = acc + h1[k] * w2[k][j]
            h2.append(jnp.maximum(acc + b2[j], 0.0))

        # Layer 3: 10 -> 1
        y = h2[0] * w3[0]
        for k in range(1, H2):
            y = y + h2[k] * w3[k]
        o_ref[0, pl.ds(r0, CHUNK), :] = y + b3


def circlemodel_forward(x, params, *, tile_rows=512):
    """x: (N, 2) float32. Returns (N, 1) float32."""
    w1, b1, w2, b2, w3, b3 = params
    N, d_in = x.shape
    assert d_in == D_IN

    packed = jnp.concatenate([
        w1.reshape(-1), b1.reshape(-1),
        w2.reshape(-1), b2.reshape(-1),
        w3.reshape(-1), b3.reshape(-1),
    ]).astype(jnp.float32)
    assert packed.shape[0] == N_PARAMS

    # Batch -> (rows, 128); rows rounded up to a multiple of 8 (sublane) and of tile_r.
    tile_rows = max(CHUNK, (tile_rows // CHUNK) * CHUNK)
    rows = -(-N // LANES)
    rows = -(-rows // CHUNK) * CHUNK
    tile_r = min(tile_rows, rows)
    rows_p = -(-rows // tile_r) * tile_r
    n_pad = rows_p * LANES

    x_pad = jnp.pad(x.astype(jnp.float32), ((0, n_pad - N), (0, 0)))
    # Layout plumbing in the wrapper: sample n -> (row=n//128, lane=n%128).
    x3 = x_pad.T.reshape(D_IN, rows_p, LANES)

    grid = (rows_p // tile_r,)

    out3 = pl.pallas_call(
        mlp_kernel,
        out_shape=jax.ShapeDtypeStruct((D_OUT, rows_p, LANES), jnp.float32),
        grid_spec=pltpu.PrefetchScalarGridSpec(
            num_scalar_prefetch=0,
            grid=grid,
            in_specs=[
                # All parameters resident in SMEM (no per-step DMA, no index_map).
                pl.BlockSpec(memory_space=pltpu.MemorySpace.SMEM),
                # Input tile: batch in (sublane, lane) dims.
                pl.BlockSpec((D_IN, tile_r, LANES), lambda i: (0, i, 0)),
            ],
            # Lane-dense output block (last dim 128 -> unmasked stores).
            out_specs=pl.BlockSpec((D_OUT, tile_r, LANES), lambda i: (0, i, 0)),
        ),
        compiler_params=pltpu.CompilerParams(
            dimension_semantics=("parallel",),
        ),
    )(packed, x3)

    # Undo the layout: (D_OUT, rows_p, 128) -> (n_pad, D_OUT) -> (N, D_OUT)
    return out3.reshape(D_OUT, n_pad).T[:N]


def init_params(key):
    """Deterministic init matching nn.Linear shapes (stored transposed as (in, out))."""
    k1, k2, k3, k4, k5, k6 = jax.random.split(key, 6)

    def linear_init(kw, kb, fan_in, fan_out):
        bound = 1.0 / jnp.sqrt(fan_in)
        w = jax.random.uniform(kw, (fan_in, fan_out), jnp.float32, -bound, bound)
        b = jax.random.uniform(kb, (1, fan_out), jnp.float32, -bound, bound)
        return w, b

    w1, b1 = linear_init(k1, k2, D_IN, H1)
    w2, b2 = linear_init(k3, k4, H1, H2)
    w3, b3 = linear_init(k5, k6, H2, D_OUT)
    return w1, b1, w2, b2, w3, b3


def reference_forward(x, params):
    w1, b1, w2, b2, w3, b3 = params
    h1 = jnp.maximum(x @ w1 + b1, 0.0)
    h2 = jnp.maximum(h1 @ w2 + b2, 0.0)
    return h2 @ w3 + b3


if __name__ == "__main__":
    key = jax.random.PRNGKey(0)
    kx, kp = jax.random.split(key)

    N = 200  # small batch, deliberately NOT a multiple of 128 to exercise padding
    x = jax.random.normal(kx, (N, D_IN), dtype=jnp.float32)
    params = init_params(kp)

    out = circlemodel_forward(x, params)
    out = jax.block_until_ready(out)

    ref = reference_forward(x, params)
    assert out.shape == (N, D_OUT)
    assert jnp.allclose(out, ref, atol=1e-5, rtol=1e-5), "mismatch vs pure-JAX reference"

    print("KERNEL_OK")
</pallas_src>

<mosaic_0001>
module attributes {stable_mosaic.version = 11 : i64} {
  func.func @mlp_kernel(%arg0: i32, %arg1: memref<229xf32, #tpu.memory_space<smem>>, %arg2: memref<2x8x128xf32, #tpu.memory_space<vmem>>, %arg3: memref<1x8x128xf32, #tpu.memory_space<vmem>>) attributes {dimension_semantics = [#tpu.dimension_semantics<parallel>], iteration_bounds = array<i64: 1>, scalar_prefetch = 0 : i64, scratch_operands = 0 : i64, tpu.core_type = #tpu.core_type<tc>, window_params = [{transform_indices = @transform_0, window_bounds = array<i64: 229>}, {transform_indices = @transform_1, window_bounds = array<i64: 2, 8, 128>}, {transform_indices = @transform_2, window_bounds = array<i64: 1, 8, 128>}]} {
    %c0 = arith.constant 0 : index
    %0 = memref.load %arg1[%c0] : memref<229xf32, #tpu.memory_space<smem>>
    %c1 = arith.constant 1 : index
    %1 = memref.load %arg1[%c1] : memref<229xf32, #tpu.memory_space<smem>>
    %c2 = arith.constant 2 : index
    %2 = memref.load %arg1[%c2] : memref<229xf32, #tpu.memory_space<smem>>
    %c3 = arith.constant 3 : index
    %3 = memref.load %arg1[%c3] : memref<229xf32, #tpu.memory_space<smem>>
    %c4 = arith.constant 4 : index
    %4 = memref.load %arg1[%c4] : memref<229xf32, #tpu.memory_space<smem>>
    %c5 = arith.constant 5 : index
    %5 = memref.load %arg1[%c5] : memref<229xf32, #tpu.memory_space<smem>>
    %c6 = arith.constant 6 : index
    %6 = memref.load %arg1[%c6] : memref<229xf32, #tpu.memory_space<smem>>
    %c7 = arith.constant 7 : index
    %7 = memref.load %arg1[%c7] : memref<229xf32, #tpu.memory_space<smem>>
    %c8 = arith.constant 8 : index
    %8 = memref.load %arg1[%c8] : memref<229xf32, #tpu.memory_space<smem>>
    %c9 = arith.constant 9 : index
    %9 = memref.load %arg1[%c9] : memref<229xf32, #tpu.memory_space<smem>>
    %c10 = arith.constant 10 : index
    %10 = memref.load %arg1[%c10] : memref<229xf32, #tpu.memory_space<smem>>
    %c11 = arith.constant 11 : index
    %11 = memref.load %arg1[%c11] : memref<229xf32, #tpu.memory_space<smem>>
    %c12 = arith.constant 12 : index
    %12 = memref.load %arg1[%c12] : memref<229xf32, #tpu.memory_space<smem>>
    %c13 = arith.constant 13 : index
    %13 = memref.load %arg1[%c13] : memref<229xf32, #tpu.memory_space<smem>>
    %c14 = arith.constant 14 : index
    %14 = memref.load %arg1[%c14] : memref<229xf32, #tpu.memory_space<smem>>
    %c15 = arith.constant 15 : index
    %15 = memref.load %arg1[%c15] : memref<229xf32, #tpu.memory_space<smem>>
    %c16 = arith.constant 16 : index
    %16 = memref.load %arg1[%c16] : memref<229xf32, #tpu.memory_space<smem>>
    %c17 = arith.constant 17 : index
    %17 = memref.load %arg1[%c17] : memref<229xf32, #tpu.memory_space<smem>>
    %c18 = arith.constant 18 : index
    %18 = memref.load %arg1[%c18] : memref<229xf32, #tpu.memory_space<smem>>
    %c19 = arith.constant 19 : index
    %19 = memref.load %arg1[%c19] : memref<229xf32, #tpu.memory_space<smem>>
    %c20 = arith.constant 20 : index
    %20 = memref.load %arg1[%c20] : memref<229xf32, #tpu.memory_space<smem>>
    %c21 = arith.constant 21 : index
    %21 = memref.load %arg1[%c21] : memref<229xf32, #tpu.memory_space<smem>>
    %c22 = arith.constant 22 : index
    %22 = memref.load %arg1[%c22] : memref<229xf32, #tpu.memory_space<smem>>
    %c23 = arith.constant 23 : index
    %23 = memref.load %arg1[%c23] : memref<229xf32, #tpu.memory_space<smem>>
    %c24 = arith.constant 24 : index
    %24 = memref.load %arg1[%c24] : memref<229xf32, #tpu.memory_space<smem>>
    %c25 = arith.constant 25 : index
    %25 = memref.load %arg1[%c25] : memref<229xf32, #tpu.memory_space<smem>>
    %c26 = arith.constant 26 : index
    %26 = memref.load %arg1[%c26] : memref<229xf32, #tpu.memory_space<smem>>
    %c27 = arith.constant 27 : index
    %27 = memref.load %arg1[%c27] : memref<229xf32, #tpu.memory_space<smem>>
    %c28 = arith.constant 28 : index
    %28 = memref.load %arg1[%c28] : memref<229xf32, #tpu.memory_space<smem>>
    %c29 = arith.constant 29 : index
    %29 = memref.load %arg1[%c29] : memref<229xf32, #tpu.memory_space<smem>>
    %c30 = arith.constant 30 : index
    %30 = memref.load %arg1[%c30] : memref<229xf32, #tpu.memory_space<smem>>
    %c31 = arith.constant 31 : index
    %31 = memref.load %arg1[%c31] : memref<229xf32, #tpu.memory_space<smem>>
    %c32 = arith.constant 32 : index
    %32 = memref.load %arg1[%c32] : memref<229xf32, #tpu.memory_space<smem>>
    %c33 = arith.constant 33 : index
    %33 = memref.load %arg1[%c33] : memref<229xf32, #tpu.memory_space<smem>>
    %c34 = arith.constant 34 : index
    %34 = memref.load %arg1[%c34] : memref<229xf32, #tpu.memory_space<smem>>
    %c35 = arith.constant 35 : index
    %35 = memref.load %arg1[%c35] : memref<229xf32, #tpu.memory_space<smem>>
    %c36 = arith.constant 36 : index
    %36 = memref.load %arg1[%c36] : memref<229xf32, #tpu.memory_space<smem>>
    %c37 = arith.constant 37 : index
    %37 = memref.load %arg1[%c37] : memref<229xf32, #tpu.memory_space<smem>>
    %c38 = arith.constant 38 : index
    %38 = memref.load %arg1[%c38] : memref<229xf32, #tpu.memory_space<smem>>
    %c39 = arith.constant 39 : index
    %39 = memref.load %arg1[%c39] : memref<229xf32, #tpu.memory_space<smem>>
    %c40 = arith.constant 40 : index
    %40 = memref.load %arg1[%c40] : memref<229xf32, #tpu.memory_space<smem>>
    %c41 = arith.constant 41 : index
    %41 = memref.load %arg1[%c41] : memref<229xf32, #tpu.memory_space<smem>>
    %c42 = arith.constant 42 : index
    %42 = memref.load %arg1[%c42] : memref<229xf32, #tpu.memory_space<smem>>
    %c43 = arith.constant 43 : index
    %43 = memref.load %arg1[%c43] : memref<229xf32, #tpu.memory_space<smem>>
    %c44 = arith.constant 44 : index
    %44 = memref.load %arg1[%c44] : memref<229xf32, #tpu.memory_space<smem>>
    %c45 = arith.constant 45 : index
    %45 = memref.load %arg1[%c45] : memref<229xf32, #tpu.memory_space<smem>>
    %c46 = arith.constant 46 : index
    %46 = memref.load %arg1[%c46] : memref<229xf32, #tpu.memory_space<smem>>
    %c47 = arith.constant 47 : index
    %47 = memref.load %arg1[%c47] : memref<229xf32, #tpu.memory_space<smem>>
    %c48 = arith.constant 48 : index
    %48 = memref.load %arg1[%c48] : memref<229xf32, #tpu.memory_space<smem>>
    %c49 = arith.constant 49 : index
    %49 = memref.load %arg1[%c49] : memref<229xf32, #tpu.memory_space<smem>>
    %c50 = arith.constant 50 : index
    %50 = memref.load %arg1[%c50] : memref<229xf32, #tpu.memory_space<smem>>
    %c51 = arith.constant 51 : index
    %51 = memref.load %arg1[%c51] : memref<229xf32, #tpu.memory_space<smem>>
    %c52 = arith.constant 52 : index
    %52 = memref.load %arg1[%c52] : memref<229xf32, #tpu.memory_space<smem>>
    %c53 = arith.constant 53 : index
    %53 = memref.load %arg1[%c53] : memref<229xf32, #tpu.memory_space<smem>>
    %c54 = arith.constant 54 : index
    %54 = memref.load %arg1[%c54] : memref<229xf32, #tpu.memory_space<smem>>
    %c55 = arith.constant 55 : index
    %55 = memref.load %arg1[%c55] : memref<229xf32, #tpu.memory_space<smem>>
    %c56 = arith.constant 56 : index
    %56 = memref.load %arg1[%c56] : memref<229xf32, #tpu.memory_space<smem>>
    %c57 = arith.constant 57 : index
    %57 = memref.load %arg1[%c57] : memref<229xf32, #tpu.memory_space<smem>>
    %c58 = arith.constant 58 : index
    %58 = memref.load %arg1[%c58] : memref<229xf32, #tpu.memory_space<smem>>
    %c59 = arith.constant 59 : index
    %59 = memref.load %arg1[%c59] : memref<229xf32, #tpu.memory_space<smem>>
    %c60 = arith.constant 60 : index
    %60 = memref.load %arg1[%c60] : memref<229xf32, #tpu.memory_space<smem>>
    %c61 = arith.constant 61 : index
    %61 = memref.load %arg1[%c61] : memref<229xf32, #tpu.memory_space<smem>>
    %c62 = arith.constant 62 : index
    %62 = memref.load %arg1[%c62] : memref<229xf32, #tpu.memory_space<smem>>
    %c63 = arith.constant 63 : index
    %63 = memref.load %arg1[%c63] : memref<229xf32, #tpu.memory_space<smem>>
    %c64 = arith.constant 64 : index
    %64 = memref.load %arg1[%c64] : memref<229xf32, #tpu.memory_space<smem>>
    %c65 = arith.constant 65 : index
    %65 = memref.load %arg1[%c65] : memref<229xf32, #tpu.memory_space<smem>>
    %c66 = arith.constant 66 : index
    %66 = memref.load %arg1[%c66] : memref<229xf32, #tpu.memory_space<smem>>
    %c67 = arith.constant 67 : index
    %67 = memref.load %arg1[%c67] : memref<229xf32, #tpu.memory_space<smem>>
    %c68 = arith.constant 68 : index
    %68 = memref.load %arg1[%c68] : memref<229xf32, #tpu.memory_space<smem>>
    %c69 = arith.constant 69 : index
    %69 = memref.load %arg1[%c69] : memref<229xf32, #tpu.memory_space<smem>>
    %c70 = arith.constant 70 : index
    %70 = memref.load %arg1[%c70] : memref<229xf32, #tpu.memory_space<smem>>
    %c71 = arith.constant 71 : index
    %71 = memref.load %arg1[%c71] : memref<229xf32, #tpu.memory_space<smem>>
    %c72 = arith.constant 72 : index
    %72 = memref.load %arg1[%c72] : memref<229xf32, #tpu.memory_space<smem>>
    %c73 = arith.constant 73 : index
    %73 = memref.load %arg1[%c73] : memref<229xf32, #tpu.memory_space<smem>>
    %c74 = arith.constant 74 : index
    %74 = memref.load %arg1[%c74] : memref<229xf32, #tpu.memory_space<smem>>
    %c75 = arith.constant 75 : index
    %75 = memref.load %arg1[%c75] : memref<229xf32, #tpu.memory_space<smem>>
    %c76 = arith.constant 76 : index
    %76 = memref.load %arg1[%c76] : memref<229xf32, #tpu.memory_space<smem>>
    %c77 = arith.constant 77 : index
    %77 = memref.load %arg1[%c77] : memref<229xf32, #tpu.memory_space<smem>>
    %c78 = arith.constant 78 : index
    %78 = memref.load %arg1[%c78] : memref<229xf32, #tpu.memory_space<smem>>
    %c79 = arith.constant 79 : index
    %79 = memref.load %arg1[%c79] : memref<229xf32, #tpu.memory_space<smem>>
    %c80 = arith.constant 80 : index
    %80 = memref.load %arg1[%c80] : memref<229xf32, #tpu.memory_space<smem>>
    %c81 = arith.constant 81 : index
    %81 = memref.load %arg1[%c81] : memref<229xf32, #tpu.memory_space<smem>>
    %c82 = arith.constant 82 : index
    %82 = memref.load %arg1[%c82] : memref<229xf32, #tpu.memory_space<smem>>
    %c83 = arith.constant 83 : index
    %83 = memref.load %arg1[%c83] : memref<229xf32, #tpu.memory_space<smem>>
    %c84 = arith.constant 84 : index
    %84 = memref.load %arg1[%c84] : memref<229xf32, #tpu.memory_space<smem>>
    %c85 = arith.constant 85 : index
    %85 = memref.load %arg1[%c85] : memref<229xf32, #tpu.memory_space<smem>>
    %c86 = arith.constant 86 : index
    %86 = memref.load %arg1[%c86] : memref<229xf32, #tpu.memory_space<smem>>
    %c87 = arith.constant 87 : index
    %87 = memref.load %arg1[%c87] : memref<229xf32, #tpu.memory_space<smem>>
    %c88 = arith.constant 88 : index
    %88 = memref.load %arg1[%c88] : memref<229xf32, #tpu.memory_space<smem>>
    %c89 = arith.constant 89 : index
    %89 = memref.load %arg1[%c89] : memref<229xf32, #tpu.memory_space<smem>>
    %c90 = arith.constant 90 : index
    %90 = memref.load %arg1[%c90] : memref<229xf32, #tpu.memory_space<smem>>
    %c91 = arith.constant 91 : index
    %91 = memref.load %arg1[%c91] : memref<229xf32, #tpu.memory_space<smem>>
    %c92 = arith.constant 92 : index
    %92 = memref.load %arg1[%c92] : memref<229xf32, #tpu.memory_space<smem>>
    %c93 = arith.constant 93 : index
    %93 = memref.load %arg1[%c93] : memref<229xf32, #tpu.memory_space<smem>>
    %c94 = arith.constant 94 : index
    %94 = memref.load %arg1[%c94] : memref<229xf32, #tpu.memory_space<smem>>
    %c95 = arith.constant 95 : index
    %95 = memref.load %arg1[%c95] : memref<229xf32, #tpu.memory_space<smem>>
    %c96 = arith.constant 96 : index
    %96 = memref.load %arg1[%c96] : memref<229xf32, #tpu.memory_space<smem>>
    %c97 = arith.constant 97 : index
    %97 = memref.load %arg1[%c97] : memref<229xf32, #tpu.memory_space<smem>>
    %c98 = arith.constant 98 : index
    %98 = memref.load %arg1[%c98] : memref<229xf32, #tpu.memory_space<smem>>
    %c99 = arith.constant 99 : index
    %99 = memref.load %arg1[%c99] : memref<229xf32, #tpu.memory_space<smem>>
    %c100 = arith.constant 100 : index
    %100 = memref.load %arg1[%c100] : memref<229xf32, #tpu.memory_space<smem>>
    %c101 = arith.constant 101 : index
    %101 = memref.load %arg1[%c101] : memref<229xf32, #tpu.memory_space<smem>>
    %c102 = arith.constant 102 : index
    %102 = memref.load %arg1[%c102] : memref<229xf32, #tpu.memory_space<smem>>
    %c103 = arith.constant 103 : index
    %103 = memref.load %arg1[%c103] : memref<229xf32, #tpu.memory_space<smem>>
    %c104 = arith.constant 104 : index
    %104 = memref.load %arg1[%c104] : memref<229xf32, #tpu.memory_space<smem>>
    %c105 = arith.constant 105 : index
    %105 = memref.load %arg1[%c105] : memref<229xf32, #tpu.memory_space<smem>>
    %c106 = arith.constant 106 : index
    %106 = memref.load %arg1[%c106] : memref<229xf32, #tpu.memory_space<smem>>
    %c107 = arith.constant 107 : index
    %107 = memref.load %arg1[%c107] : memref<229xf32, #tpu.memory_space<smem>>
    %c108 = arith.constant 108 : index
    %108 = memref.load %arg1[%c108] : memref<229xf32, #tpu.memory_space<smem>>
    %c109 = arith.constant 109 : index
    %109 = memref.load %arg1[%c109] : memref<229xf32, #tpu.memory_space<smem>>
    %c110 = arith.constant 110 : index
    %110 = memref.load %arg1[%c110] : memref<229xf32, #tpu.memory_space<smem>>
    %c111 = arith.constant 111 : index
    %111 = memref.load %arg1[%c111] : memref<229xf32, #tpu.memory_space<smem>>
    %c112 = arith.constant 112 : index
    %112 = memref.load %arg1[%c112] : memref<229xf32, #tpu.memory_space<smem>>
    %c113 = arith.constant 113 : index
    %113 = memref.load %arg1[%c113] : memref<229xf32, #tpu.memory_space<smem>>
    %c114 = arith.constant 114 : index
    %114 = memref.load %arg1[%c114] : memref<229xf32, #tpu.memory_space<smem>>
    %c115 = arith.constant 115 : index
    %115 = memref.load %arg1[%c115] : memref<229xf32, #tpu.memory_space<smem>>
    %c116 = arith.constant 116 : index
    %116 = memref.load %arg1[%c116] : memref<229xf32, #tpu.memory_space<smem>>
    %c117 = arith.constant 117 : index
    %117 = memref.load %arg1[%c117] : memref<229xf32, #tpu.memory_space<smem>>
    %c118 = arith.constant 118 : index
    %118 = memref.load %arg1[%c118] : memref<229xf32, #tpu.memory_space<smem>>
    %c119 = arith.constant 119 : index
    %119 = memref.load %arg1[%c119] : memref<229xf32, #tpu.memory_space<smem>>
    %c120 = arith.constant 120 : index
    %120 = memref.load %arg1[%c120] : memref<229xf32, #tpu.memory_space<smem>>
    %c121 = arith.constant 121 : index
    %121 = memref.load %arg1[%c121] : memref<229xf32, #tpu.memory_space<smem>>
    %c122 = arith.constant 122 : index
    %122 = memref.load %arg1[%c122] : memref<229xf32, #tpu.memory_space<smem>>
    %c123 = arith.constant 123 : index
    %123 = memref.load %arg1[%c123] : memref<229xf32, #tpu.memory_space<smem>>
    %c124 = arith.constant 124 : index
    %124 = memref.load %arg1[%c124] : memref<229xf32, #tpu.memory_space<smem>>
    %c125 = arith.constant 125 : index
    %125 = memref.load %arg1[%c125] : memref<229xf32, #tpu.memory_space<smem>>
    %c126 = arith.constant 126 : index
    %126 = memref.load %arg1[%c126] : memref<229xf32, #tpu.memory_space<smem>>
    %c127 = arith.constant 127 : index
    %127 = memref.load %arg1[%c127] : memref<229xf32, #tpu.memory_space<smem>>
    %c128 = arith.constant 128 : index
    %128 = memref.load %arg1[%c128] : memref<229xf32, #tpu.memory_space<smem>>
    %c129 = arith.constant 129 : index
    %129 = memref.load %arg1[%c129] : memref<229xf32, #tpu.memory_space<smem>>
    %c130 = arith.constant 130 : index
    %130 = memref.load %arg1[%c130] : memref<229xf32, #tpu.memory_space<smem>>
    %c131 = arith.constant 131 : index
    %131 = memref.load %arg1[%c131] : memref<229xf32, #tpu.memory_space<smem>>
    %c132 = arith.constant 132 : index
    %132 = memref.load %arg1[%c132] : memref<229xf32, #tpu.memory_space<smem>>
    %c133 = arith.constant 133 : index
    %133 = memref.load %arg1[%c133] : memref<229xf32, #tpu.memory_space<smem>>
    %c134 = arith.constant 134 : index
    %134 = memref.load %arg1[%c134] : memref<229xf32, #tpu.memory_space<smem>>
    %c135 = arith.constant 135 : index
    %135 = memref.load %arg1[%c135] : memref<229xf32, #tpu.memory_space<smem>>
    %c136 = arith.constant 136 : index
    %136 = memref.load %arg1[%c136] : memref<229xf32, #tpu.memory_space<smem>>
    %c137 = arith.constant 137 : index
    %137 = memref.load %arg1[%c137] : memref<229xf32, #tpu.memory_space<smem>>
    %c138 = arith.constant 138 : index
    %138 = memref.load %arg1[%c138] : memref<229xf32, #tpu.memory_space<smem>>
    %c139 = arith.constant 139 : index
    %139 = memref.load %arg1[%c139] : memref<229xf32, #tpu.memory_space<smem>>
    %c140 = arith.constant 140 : index
    %140 = memref.load %arg1[%c140] : memref<229xf32, #tpu.memory_space<smem>>
    %c141 = arith.constant 141 : index
    %141 = memref.load %arg1[%c141] : memref<229xf32, #tpu.memory_space<smem>>
    %c142 = arith.constant 142 : index
    %142 = memref.load %arg1[%c142] : memref<229xf32, #tpu.memory_space<smem>>
    %c143 = arith.constant 143 : index
    %143 = memref.load %arg1[%c143] : memref<229xf32, #tpu.memory_space<smem>>
    %c144 = arith.constant 144 : index
    %144 = memref.load %arg1[%c144] : memref<229xf32, #tpu.memory_space<smem>>
    %c145 = arith.constant 145 : index
    %145 = memref.load %arg1[%c145] : memref<229xf32, #tpu.memory_space<smem>>
    %c146 = arith.constant 146 : index
    %146 = memref.load %arg1[%c146] : memref<229xf32, #tpu.memory_space<smem>>
    %c147 = arith.constant 147 : index
    %147 = memref.load %arg1[%c147] : memref<229xf32, #tpu.memory_space<smem>>
    %c148 = arith.constant 148 : index
    %148 = memref.load %arg1[%c148] : memref<229xf32, #tpu.memory_space<smem>>
    %c149 = arith.constant 149 : index
    %149 = memref.load %arg1[%c149] : memref<229xf32, #tpu.memory_space<smem>>
    %c150 = arith.constant 150 : index
    %150 = memref.load %arg1[%c150] : memref<229xf32, #tpu.memory_space<smem>>
    %c151 = arith.constant 151 : index
    %151 = memref.load %arg1[%c151] : memref<229xf32, #tpu.memory_space<smem>>
    %c152 = arith.constant 152 : index
    %152 = memref.load %arg1[%c152] : memref<229xf32, #tpu.memory_space<smem>>
    %c153 = arith.constant 153 : index
    %153 = memref.load %arg1[%c153] : memref<229xf32, #tpu.memory_space<smem>>
    %c154 = arith.constant 154 : index
    %154 = memref.load %arg1[%c154] : memref<229xf32, #tpu.memory_space<smem>>
    %c155 = arith.constant 155 : index
    %155 = memref.load %arg1[%c155] : memref<229xf32, #tpu.memory_space<smem>>
    %c156 = arith.constant 156 : index
    %156 = memref.load %arg1[%c156] : memref<229xf32, #tpu.memory_space<smem>>
    %c157 = arith.constant 157 : index
    %157 = memref.load %arg1[%c157] : memref<229xf32, #tpu.memory_space<smem>>
    %c158 = arith.constant 158 : index
    %158 = memref.load %arg1[%c158] : memref<229xf32, #tpu.memory_space<smem>>
    %c159 = arith.constant 159 : index
    %159 = memref.load %arg1[%c159] : memref<229xf32, #tpu.memory_space<smem>>
    %c160 = arith.constant 160 : index
    %160 = memref.load %arg1[%c160] : memref<229xf32, #tpu.memory_space<smem>>
    %c161 = arith.constant 161 : index
    %161 = memref.load %arg1[%c161] : memref<229xf32, #tpu.memory_space<smem>>
    %c162 = arith.constant 162 : index
    %162 = memref.load %arg1[%c162] : memref<229xf32, #tpu.memory_space<smem>>
    %c163 = arith.constant 163 : index
    %163 = memref.load %arg1[%c163] : memref<229xf32, #tpu.memory_space<smem>>
    %c164 = arith.constant 164 : index
    %164 = memref.load %arg1[%c164] : memref<229xf32, #tpu.memory_space<smem>>
    %c165 = arith.constant 165 : index
    %165 = memref.load %arg1[%c165] : memref<229xf32, #tpu.memory_space<smem>>
    %c166 = arith.constant 166 : index
    %166 = memref.load %arg1[%c166] : memref<229xf32, #tpu.memory_space<smem>>
    %c167 = arith.constant 167 : index
    %167 = memref.load %arg1[%c167] : memref<229xf32, #tpu.memory_space<smem>>
    %c168 = arith.constant 168 : index
    %168 = memref.load %arg1[%c168] : memref<229xf32, #tpu.memory_space<smem>>
    %c169 = arith.constant 169 : index
    %169 = memref.load %arg1[%c169] : memref<229xf32, #tpu.memory_space<smem>>
    %c170 = arith.constant 170 : index
    %170 = memref.load %arg1[%c170] : memref<229xf32, #tpu.memory_space<smem>>
    %c171 = arith.constant 171 : index
    %171 = memref.load %arg1[%c171] : memref<229xf32, #tpu.memory_space<smem>>
    %c172 = arith.constant 172 : index
    %172 = memref.load %arg1[%c172] : memref<229xf32, #tpu.memory_space<smem>>
    %c173 = arith.constant 173 : index
    %173 = memref.load %arg1[%c173] : memref<229xf32, #tpu.memory_space<smem>>
    %c174 = arith.constant 174 : index
    %174 = memref.load %arg1[%c174] : memref<229xf32, #tpu.memory_space<smem>>
    %c175 = arith.constant 175 : index
    %175 = memref.load %arg1[%c175] : memref<229xf32, #tpu.memory_space<smem>>
    %c176 = arith.constant 176 : index
    %176 = memref.load %arg1[%c176] : memref<229xf32, #tpu.memory_space<smem>>
    %c177 = arith.constant 177 : index
    %177 = memref.load %arg1[%c177] : memref<229xf32, #tpu.memory_space<smem>>
    %c178 = arith.constant 178 : index
    %178 = memref.load %arg1[%c178] : memref<229xf32, #tpu.memory_space<smem>>
    %c179 = arith.constant 179 : index
    %179 = memref.load %arg1[%c179] : memref<229xf32, #tpu.memory_space<smem>>
    %c180 = arith.constant 180 : index
    %180 = memref.load %arg1[%c180] : memref<229xf32, #tpu.memory_space<smem>>
    %c181 = arith.constant 181 : index
    %181 = memref.load %arg1[%c181] : memref<229xf32, #tpu.memory_space<smem>>
    %c182 = arith.constant 182 : index
    %182 = memref.load %arg1[%c182] : memref<229xf32, #tpu.memory_space<smem>>
    %c183 = arith.constant 183 : index
    %183 = memref.load %arg1[%c183] : memref<229xf32, #tpu.memory_space<smem>>
    %c184 = arith.constant 184 : index
    %184 = memref.load %arg1[%c184] : memref<229xf32, #tpu.memory_space<smem>>
    %c185 = arith.constant 185 : index
    %185 = memref.load %arg1[%c185] : memref<229xf32, #tpu.memory_space<smem>>
    %c186 = arith.constant 186 : index
    %186 = memref.load %arg1[%c186] : memref<229xf32, #tpu.memory_space<smem>>
    %c187 = arith.constant 187 : index
    %187 = memref.load %arg1[%c187] : memref<229xf32, #tpu.memory_space<smem>>
    %c188 = arith.constant 188 : index
    %188 = memref.load %arg1[%c188] : memref<229xf32, #tpu.memory_space<smem>>
    %c189 = arith.constant 189 : index
    %189 = memref.load %arg1[%c189] : memref<229xf32, #tpu.memory_space<smem>>
    %c190 = arith.constant 190 : index
    %190 = memref.load %arg1[%c190] : memref<229xf32, #tpu.memory_space<smem>>
    %c191 = arith.constant 191 : index
    %191 = memref.load %arg1[%c191] : memref<229xf32, #tpu.memory_space<smem>>
    %c192 = arith.constant 192 : index
    %192 = memref.load %arg1[%c192] : memref<229xf32, #tpu.memory_space<smem>>
    %c193 = arith.constant 193 : index
    %193 = memref.load %arg1[%c193] : memref<229xf32, #tpu.memory_space<smem>>
    %c194 = arith.constant 194 : index
    %194 = memref.load %arg1[%c194] : memref<229xf32, #tpu.memory_space<smem>>
    %c195 = arith.constant 195 : index
    %195 = memref.load %arg1[%c195] : memref<229xf32, #tpu.memory_space<smem>>
    %c196 = arith.constant 196 : index
    %196 = memref.load %arg1[%c196] : memref<229xf32, #tpu.memory_space<smem>>
    %c197 = arith.constant 197 : index
    %197 = memref.load %arg1[%c197] : memref<229xf32, #tpu.memory_space<smem>>
    %c198 = arith.constant 198 : index
    %198 = memref.load %arg1[%c198] : memref<229xf32, #tpu.memory_space<smem>>
    %c199 = arith.constant 199 : index
    %199 = memref.load %arg1[%c199] : memref<229xf32, #tpu.memory_space<smem>>
    %c200 = arith.constant 200 : index
    %200 = memref.load %arg1[%c200] : memref<229xf32, #tpu.memory_space<smem>>
    %c201 = arith.constant 201 : index
    %201 = memref.load %arg1[%c201] : memref<229xf32, #tpu.memory_space<smem>>
    %c202 = arith.constant 202 : index
    %202 = memref.load %arg1[%c202] : memref<229xf32, #tpu.memory_space<smem>>
    %c203 = arith.constant 203 : index
    %203 = memref.load %arg1[%c203] : memref<229xf32, #tpu.memory_space<smem>>
    %c204 = arith.constant 204 : index
    %204 = memref.load %arg1[%c204] : memref<229xf32, #tpu.memory_space<smem>>
    %c205 = arith.constant 205 : index
    %205 = memref.load %arg1[%c205] : memref<229xf32, #tpu.memory_space<smem>>
    %c206 = arith.constant 206 : index
    %206 = memref.load %arg1[%c206] : memref<229xf32, #tpu.memory_space<smem>>
    %c207 = arith.constant 207 : index
    %207 = memref.load %arg1[%c207] : memref<229xf32, #tpu.memory_space<smem>>
    %c208 = arith.constant 208 : index
    %208 = memref.load %arg1[%c208] : memref<229xf32, #tpu.memory_space<smem>>
    %c209 = arith.constant 209 : index
    %209 = memref.load %arg1[%c209] : memref<229xf32, #tpu.memory_space<smem>>
    %c210 = arith.constant 210 : index
    %210 = memref.load %arg1[%c210] : memref<229xf32, #tpu.memory_space<smem>>
    %c211 = arith.constant 211 : index
    %211 = memref.load %arg1[%c211] : memref<229xf32, #tpu.memory_space<smem>>
    %c212 = arith.constant 212 : index
    %212 = memref.load %arg1[%c212] : memref<229xf32, #tpu.memory_space<smem>>
    %c213 = arith.constant 213 : index
    %213 = memref.load %arg1[%c213] : memref<229xf32, #tpu.memory_space<smem>>
    %c214 = arith.constant 214 : index
    %214 = memref.load %arg1[%c214] : memref<229xf32, #tpu.memory_space<smem>>
    %c215 = arith.constant 215 : index
    %215 = memref.load %arg1[%c215] : memref<229xf32, #tpu.memory_space<smem>>
    %c216 = arith.constant 216 : index
    %216 = memref.load %arg1[%c216] : memref<229xf32, #tpu.memory_space<smem>>
    %c217 = arith.constant 217 : index
    %217 = memref.load %arg1[%c217] : memref<229xf32, #tpu.memory_space<smem>>
    %c218 = arith.constant 218 : index
    %218 = memref.load %arg1[%c218] : memref<229xf32, #tpu.memory_space<smem>>
    %c219 = arith.constant 219 : index
    %219 = memref.load %arg1[%c219] : memref<229xf32, #tpu.memory_space<smem>>
    %c220 = arith.constant 220 : index
    %220 = memref.load %arg1[%c220] : memref<229xf32, #tpu.memory_space<smem>>
    %c221 = arith.constant 221 : index
    %221 = memref.load %arg1[%c221] : memref<229xf32, #tpu.memory_space<smem>>
    %c222 = arith.constant 222 : index
    %222 = memref.load %arg1[%c222] : memref<229xf32, #tpu.memory_space<smem>>
    %c223 = arith.constant 223 : index
    %223 = memref.load %arg1[%c223] : memref<229xf32, #tpu.memory_space<smem>>
    %c224 = arith.constant 224 : index
    %224 = memref.load %arg1[%c224] : memref<229xf32, #tpu.memory_space<smem>>
    %c225 = arith.constant 225 : index
    %225 = memref.load %arg1[%c225] : memref<229xf32, #tpu.memory_space<smem>>
    %c226 = arith.constant 226 : index
    %226 = memref.load %arg1[%c226] : memref<229xf32, #tpu.memory_space<smem>>
    %c227 = arith.constant 227 : index
    %227 = memref.load %arg1[%c227] : memref<229xf32, #tpu.memory_space<smem>>
    %c228 = arith.constant 228 : index
    %228 = memref.load %arg1[%c228] : memref<229xf32, #tpu.memory_space<smem>>
    %c0_i32 = arith.constant 0 : i32
    %c1_i32 = arith.constant 1 : i32
    %229 = arith.muli %c0_i32, %c1_i32 : i32
    %c0_i32_0 = arith.constant 0 : i32
    %230 = arith.addi %c0_i32_0, %229 : i32
    %c8_i32 = arith.constant 8 : i32
    %231 = arith.muli %230, %c8_i32 : i32
    %232 = tpu.assume_multiple %231, 8 : i32
    %c0_1 = arith.constant 0 : index
    %233 = arith.index_cast %232 : i32 to index
    %c0_2 = arith.constant 0 : index
    %234 = vector.load %arg2[%c0_1, %233, %c0_2] : memref<2x8x128xf32, #tpu.memory_space<vmem>>, vector<1x8x128xf32>
    %235 = vector.shape_cast %234 : vector<1x8x128xf32> to vector<8x128xf32>
    %c1_3 = arith.constant 1 : index
    %236 = arith.index_cast %232 : i32 to index
    %c0_4 = arith.constant 0 : index
    %237 = vector.load %arg2[%c1_3, %236, %c0_4] : memref<2x8x128xf32, #tpu.memory_space<vmem>>, vector<1x8x128xf32>
    %238 = vector.shape_cast %237 : vector<1x8x128xf32> to vector<8x128xf32>
    %239 = vector.broadcast %0 : f32 to vector<8x128xf32>
    %240 = arith.mulf %235, %239 : vector<8x128xf32>
    %241 = vector.broadcast %16 : f32 to vector<8x128xf32>
    %242 = arith.mulf %238, %241 : vector<8x128xf32>
    %243 = arith.addf %240, %242 : vector<8x128xf32>
    %244 = vector.broadcast %32 : f32 to vector<8x128xf32>
    %245 = arith.addf %243, %244 : vector<8x128xf32>
    %cst = arith.constant 0.000000e+00 : f32
    %246 = vector.broadcast %cst : f32 to vector<8x128xf32>
    %247 = arith.maximumf %245, %246 : vector<8x128xf32>
    %248 = vector.broadcast %1 : f32 to vector<8x128xf32>
    %249 = arith.mulf %235, %248 : vector<8x128xf32>
    %250 = vector.broadcast %17 : f32 to vector<8x128xf32>
    %251 = arith.mulf %238, %250 : vector<8x128xf32>
    %252 = arith.addf %249, %251 : vector<8x128xf32>
    %253 = vector.broadcast %33 : f32 to vector<8x128xf32>
    %254 = arith.addf %252, %253 : vector<8x128xf32>
    %cst_5 = arith.constant 0.000000e+00 : f32
    %255 = vector.broadcast %cst_5 : f32 to vector<8x128xf32>
    %256 = arith.maximumf %254, %255 : vector<8x128xf32>
    %257 = vector.broadcast %2 : f32 to vector<8x128xf32>
    %258 = arith.mulf %235, %257 : vector<8x128xf32>
    %259 = vector.broadcast %18 : f32 to vector<8x128xf32>
    %260 = arith.mulf %238, %259 : vector<8x128xf32>
    %261 = arith.addf %258, %260 : vector<8x128xf32>
    %262 = vector.broadcast %34 : f32 to vector<8x128xf32>
    %263 = arith.addf %261, %262 : vector<8x128xf32>
    %cst_6 = arith.constant 0.000000e+00 : f32
    %264 = vector.broadcast %cst_6 : f32 to vector<8x128xf32>
    %265 = arith.maximumf %263, %264 : vector<8x128xf32>
    %266 = vector.broadcast %3 : f32 to vector<8x128xf32>
    %267 = arith.mulf %235, %266 : vector<8x128xf32>
    %268 = vector.broadcast %19 : f32 to vector<8x128xf32>
    %269 = arith.mulf %238, %268 : vector<8x128xf32>
    %270 = arith.addf %267, %269 : vector<8x128xf32>
    %271 = vector.broadcast %35 : f32 to vector<8x128xf32>
    %272 = arith.addf %270, %271 : vector<8x128xf32>
    %cst_7 = arith.constant 0.000000e+00 : f32
    %273 = vector.broadcast %cst_7 : f32 to vector<8x128xf32>
    %274 = arith.maximumf %272, %273 : vector<8x128xf32>
    %275 = vector.broadcast %4 : f32 to vector<8x128xf32>
    %276 = arith.mulf %235, %275 : vector<8x128xf32>
    %277 = vector.broadcast %20 : f32 to vector<8x128xf32>
    %278 = arith.mulf %238, %277 : vector<8x128xf32>
    %279 = arith.addf %276, %278 : vector<8x128xf32>
    %280 = vector.broadcast %36 : f32 to vector<8x128xf32>
    %281 = arith.addf %279, %280 : vector<8x128xf32>
    %cst_8 = arith.constant 0.000000e+00 : f32
    %282 = vector.broadcast %cst_8 : f32 to vector<8x128xf32>
    %283 = arith.maximumf %281, %282 : vector<8x128xf32>
    %284 = vector.broadcast %5 : f32 to vector<8x128xf32>
    %285 = arith.mulf %235, %284 : vector<8x128xf32>
    %286 = vector.broadcast %21 : f32 to vector<8x128xf32>
    %287 = arith.mulf %238, %286 : vector<8x128xf32>
    %288 = arith.addf %285, %287 : vector<8x128xf32>
    %289 = vector.broadcast %37 : f32 to vector<8x128xf32>
    %290 = arith.addf %288, %289 : vector<8x128xf32>
    %cst_9 = arith.constant 0.000000e+00 : f32
    %291 = vector.broadcast %cst_9 : f32 to vector<8x128xf32>
    %292 = arith.maximumf %290, %291 : vector<8x128xf32>
    %293 = vector.broadcast %6 : f32 to vector<8x128xf32>
    %294 = arith.mulf %235, %293 : vector<8x128xf32>
    %295 = vector.broadcast %22 : f32 to vector<8x128xf32>
    %296 = arith.mulf %238, %295 : vector<8x128xf32>
    %297 = arith.addf %294, %296 : vector<8x128xf32>
    %298 = vector.broadcast %38 : f32 to vector<8x128xf32>
    %299 = arith.addf %297, %298 : vector<8x128xf32>
    %cst_10 = arith.constant 0.000000e+00 : f32
    %300 = vector.broadcast %cst_10 : f32 to vector<8x128xf32>
    %301 = arith.maximumf %299, %300 : vector<8x128xf32>
    %302 = vector.broadcast %7 : f32 to vector<8x128xf32>
    %303 = arith.mulf %235, %302 : vector<8x128xf32>
    %304 = vector.broadcast %23 : f32 to vector<8x128xf32>
    %305 = arith.mulf %238, %304 : vector<8x128xf32>
    %306 = arith.addf %303, %305 : vector<8x128xf32>
    %307 = vector.broadcast %39 : f32 to vector<8x128xf32>
    %308 = arith.addf %306, %307 : vector<8x128xf32>
    %cst_11 = arith.constant 0.000000e+00 : f32
    %309 = vector.broadcast %cst_11 : f32 to vector<8x128xf32>
    %310 = arith.maximumf %308, %309 : vector<8x128xf32>
    %311 = vector.broadcast %8 : f32 to vector<8x128xf32>
    %312 = arith.mulf %235, %311 : vector<8x128xf32>
    %313 = vector.broadcast %24 : f32 to vector<8x128xf32>
    %314 = arith.mulf %238, %313 : vector<8x128xf32>
    %315 = arith.addf %312, %314 : vector<8x128xf32>
    %316 = vector.broadcast %40 : f32 to vector<8x128xf32>
    %317 = arith.addf %315, %316 : vector<8x128xf32>
    %cst_12 = arith.constant 0.000000e+00 : f32
    %318 = vector.broadcast %cst_12 : f32 to vector<8x128xf32>
    %319 = arith.maximumf %317, %318 : vector<8x128xf32>
    %320 = vector.broadcast %9 : f32 to vector<8x128xf32>
    %321 = arith.mulf %235, %320 : vector<8x128xf32>
    %322 = vector.broadcast %25 : f32 to vector<8x128xf32>
    %323 = arith.mulf %238, %322 : vector<8x128xf32>
    %324 = arith.addf %321, %323 : vector<8x128xf32>
    %325 = vector.broadcast %41 : f32 to vector<8x128xf32>
    %326 = arith.addf %324, %325 : vector<8x128xf32>
    %cst_13 = arith.constant 0.000000e+00 : f32
    %327 = vector.broadcast %cst_13 : f32 to vector<8x128xf32>
    %328 = arith.maximumf %326, %327 : vector<8x128xf32>
    %329 = vector.broadcast %10 : f32 to vector<8x128xf32>
    %330 = arith.mulf %235, %329 : vector<8x128xf32>
    %331 = vector.broadcast %26 : f32 to vector<8x128xf32>
    %332 = arith.mulf %238, %331 : vector<8x128xf32>
    %333 = arith.addf %330, %332 : vector<8x128xf32>
    %334 = vector.broadcast %42 : f32 to vector<8x128xf32>
    %335 = arith.addf %333, %334 : vector<8x128xf32>
    %cst_14 = arith.constant 0.000000e+00 : f32
    %336 = vector.broadcast %cst_14 : f32 to vector<8x128xf32>
    %337 = arith.maximumf %335, %336 : vector<8x128xf32>
    %338 = vector.broadcast %11 : f32 to vector<8x128xf32>
    %339 = arith.mulf %235, %338 : vector<8x128xf32>
    %340 = vector.broadcast %27 : f32 to vector<8x128xf32>
    %341 = arith.mulf %238, %340 : vector<8x128xf32>
    %342 = arith.addf %339, %341 : vector<8x128xf32>
    %343 = vector.broadcast %43 : f32 to vector<8x128xf32>
    %344 = arith.addf %342, %343 : vector<8x128xf32>
    %cst_15 = arith.constant 0.000000e+00 : f32
    %345 = vector.broadcast %cst_15 : f32 to vector<8x128xf32>
    %346 = arith.maximumf %344, %345 : vector<8x128xf32>
    %347 = vector.broadcast %12 : f32 to vector<8x128xf32>
    %348 = arith.mulf %235, %347 : vector<8x128xf32>
    %349 = vector.broadcast %28 : f32 to vector<8x128xf32>
    %350 = arith.mulf %238, %349 : vector<8x128xf32>
    %351 = arith.addf %348, %350 : vector<8x128xf32>
    %352 = vector.broadcast %44 : f32 to vector<8x128xf32>
    %353 = arith.addf %351, %352 : vector<8x128xf32>
    %cst_16 = arith.constant 0.000000e+00 : f32
    %354 = vector.broadcast %cst_16 : f32 to vector<8x128xf32>
    %355 = arith.maximumf %353, %354 : vector<8x128xf32>
    %356 = vector.broadcast %13 : f32 to vector<8x128xf32>
    %357 = arith.mulf %235, %356 : vector<8x128xf32>
    %358 = vector.broadcast %29 : f32 to vector<8x128xf32>
    %359 = arith.mulf %238, %358 : vector<8x128xf32>
    %360 = arith.addf %357, %359 : vector<8x128xf32>
    %361 = vector.broadcast %45 : f32 to vector<8x128xf32>
    %362 = arith.addf %360, %361 : vector<8x128xf32>
    %cst_17 = arith.constant 0.000000e+00 : f32
    %363 = vector.broadcast %cst_17 : f32 to vector<8x128xf32>
    %364 = arith.maximumf %362, %363 : vector<8x128xf32>
    %365 = vector.broadcast %14 : f32 to vector<8x128xf32>
    %366 = arith.mulf %235, %365 : vector<8x128xf32>
    %367 = vector.broadcast %30 : f32 to vector<8x128xf32>
    %368 = arith.mulf %238, %367 : vector<8x128xf32>
    %369 = arith.addf %366, %368 : vector<8x128xf32>
    %370 = vector.broadcast %46 : f32 to vector<8x128xf32>
    %371 = arith.addf %369, %370 : vector<8x128xf32>
    %cst_18 = arith.constant 0.000000e+00 : f32
    %372 = vector.broadcast %cst_18 : f32 to vector<8x128xf32>
    %373 = arith.maximumf %371, %372 : vector<8x128xf32>
    %374 = vector.broadcast %15 : f32 to vector<8x128xf32>
    %375 = arith.mulf %235, %374 : vector<8x128xf32>
    %376 = vector.broadcast %31 : f32 to vector<8x128xf32>
    %377 = arith.mulf %238, %376 : vector<8x128xf32>
    %378 = arith.addf %375, %377 : vector<8x128xf32>
    %379 = vector.broadcast %47 : f32 to vector<8x128xf32>
    %380 = arith.addf %378, %379 : vector<8x128xf32>
    %cst_19 = arith.constant 0.000000e+00 : f32
    %381 = vector.broadcast %cst_19 : f32 to vector<8x128xf32>
    %382 = arith.maximumf %380, %381 : vector<8x128xf32>
    %383 = vector.broadcast %48 : f32 to vector<8x128xf32>
    %384 = arith.mulf %247, %383 : vector<8x128xf32>
    %385 = vector.broadcast %58 : f32 to vector<8x128xf32>
    %386 = arith.mulf %256, %385 : vector<8x128xf32>
    %387 = arith.addf %384, %386 : vector<8x128xf32>
    %388 = vector.broadcast %68 : f32 to vector<8x128xf32>
    %389 = arith.mulf %265, %388 : vector<8x128xf32>
    %390 = arith.addf %387, %389 : vector<8x128xf32>
    %391 = vector.broadcast %78 : f32 to vector<8x128xf32>
    %392 = arith.mulf %274, %391 : vector<8x128xf32>
    %393 = arith.addf %390, %392 : vector<8x128xf32>
    %394 = vector.broadcast %88 : f32 to vector<8x128xf32>
    %395 = arith.mulf %283, %394 : vector<8x128xf32>
    %396 = arith.addf %393, %395 : vector<8x128xf32>
    %397 = vector.broadcast %98 : f32 to vector<8x128xf32>
    %398 = arith.mulf %292, %397 : vector<8x128xf32>
    %399 = arith.addf %396, %398 : vector<8x128xf32>
    %400 = vector.broadcast %108 : f32 to vector<8x128xf32>
    %401 = arith.mulf %301, %400 : vector<8x128xf32>
    %402 = arith.addf %399, %401 : vector<8x128xf32>
    %403 = vector.broadcast %118 : f32 to vector<8x128xf32>
    %404 = arith.mulf %310, %403 : vector<8x128xf32>
    %405 = arith.addf %402, %404 : vector<8x128xf32>
    %406 = vector.broadcast %128 : f32 to vector<8x128xf32>
    %407 = arith.mulf %319, %406 : vector<8x128xf32>
    %408 = arith.addf %405, %407 : vector<8x128xf32>
    %409 = vector.broadcast %138 : f32 to vector<8x128xf32>
    %410 = arith.mulf %328, %409 : vector<8x128xf32>
    %411 = arith.addf %408, %410 : vector<8x128xf32>
    %412 = vector.broadcast %148 : f32 to vector<8x128xf32>
    %413 = arith.mulf %337, %412 : vector<8x128xf32>
    %414 = arith.addf %411, %413 : vector<8x128xf32>
    %415 = vector.broadcast %158 : f32 to vector<8x128xf32>
    %416 = arith.mulf %346, %415 : vector<8x128xf32>
    %417 = arith.addf %414, %416 : vector<8x128xf32>
    %418 = vector.broadcast %168 : f32 to vector<8x128xf32>
    %419 = arith.mulf %355, %418 : vector<8x128xf32>
    %420 = arith.addf %417, %419 : vector<8x128xf32>
    %421 = vector.broadcast %178 : f32 to vector<8x128xf32>
    %422 = arith.mulf %364, %421 : vector<8x128xf32>
    %423 = arith.addf %420, %422 : vector<8x128xf32>
    %424 = vector.broadcast %188 : f32 to vector<8x128xf32>
    %425 = arith.mulf %373, %424 : vector<8x128xf32>
    %426 = arith.addf %423, %425 : vector<8x128xf32>
    %427 = vector.broadcast %198 : f32 to vector<8x128xf32>
    %428 = arith.mulf %382, %427 : vector<8x128xf32>
    %429 = arith.addf %426, %428 : vector<8x128xf32>
    %430 = vector.broadcast %208 : f32 to vector<8x128xf32>
    %431 = arith.addf %429, %430 : vector<8x128xf32>
    %cst_20 = arith.constant 0.000000e+00 : f32
    %432 = vector.broadcast %cst_20 : f32 to vector<8x128xf32>
    %433 = arith.maximumf %431, %432 : vector<8x128xf32>
    %434 = vector.broadcast %49 : f32 to vector<8x128xf32>
    %435 = arith.mulf %247, %434 : vector<8x128xf32>
    %436 = vector.broadcast %59 : f32 to vector<8x128xf32>
    %437 = arith.mulf %256, %436 : vector<8x128xf32>
    %438 = arith.addf %435, %437 : vector<8x128xf32>
    %439 = vector.broadcast %69 : f32 to vector<8x128xf32>
    %440 = arith.mulf %265, %439 : vector<8x128xf32>
    %441 = arith.addf %438, %440 : vector<8x128xf32>
    %442 = vector.broadcast %79 : f32 to vector<8x128xf32>
    %443 = arith.mulf %274, %442 : vector<8x128xf32>
    %444 = arith.addf %441, %443 : vector<8x128xf32>
    %445 = vector.broadcast %89 : f32 to vector<8x128xf32>
    %446 = arith.mulf %283, %445 : vector<8x128xf32>
    %447 = arith.addf %444, %446 : vector<8x128xf32>
    %448 = vector.broadcast %99 : f32 to vector<8x128xf32>
    %449 = arith.mulf %292, %448 : vector<8x128xf32>
    %450 = arith.addf %447, %449 : vector<8x128xf32>
    %451 = vector.broadcast %109 : f32 to vector<8x128xf32>
    %452 = arith.mulf %301, %451 : vector<8x128xf32>
    %453 = arith.addf %450, %452 : vector<8x128xf32>
    %454 = vector.broadcast %119 : f32 to vector<8x128xf32>
    %455 = arith.mulf %310, %454 : vector<8x128xf32>
    %456 = arith.addf %453, %455 : vector<8x128xf32>
    %457 = vector.broadcast %129 : f32 to vector<8x128xf32>
    %458 = arith.mulf %319, %457 : vector<8x128xf32>
    %459 = arith.addf %456, %458 : vector<8x128xf32>
    %460 = vector.broadcast %139 : f32 to vector<8x128xf32>
    %461 = arith.mulf %328, %460 : vector<8x128xf32>
    %462 = arith.addf %459, %461 : vector<8x128xf32>
    %463 = vector.broadcast %149 : f32 to vector<8x128xf32>
    %464 = arith.mulf %337, %463 : vector<8x128xf32>
    %465 = arith.addf %462, %464 : vector<8x128xf32>
    %466 = vector.broadcast %159 : f32 to vector<8x128xf32>
    %467 = arith.mulf %346, %466 : vector<8x128xf32>
    %468 = arith.addf %465, %467 : vector<8x128xf32>
    %469 = vector.broadcast %169 : f32 to vector<8x128xf32>
    %470 = arith.mulf %355, %469 : vector<8x128xf32>
    %471 = arith.addf %468, %470 : vector<8x128xf32>
    %472 = vector.broadcast %179 : f32 to vector<8x128xf32>
    %473 = arith.mulf %364, %472 : vector<8x128xf32>
    %474 = arith.addf %471, %473 : vector<8x128xf32>
    %475 = vector.broadcast %189 : f32 to vector<8x128xf32>
    %476 = arith.mulf %373, %475 : vector<8x128xf32>
    %477 = arith.addf %474, %476 : vector<8x128xf32>
    %478 = vector.broadcast %199 : f32 to vector<8x128xf32>
    %479 = arith.mulf %382, %478 : vector<8x128xf32>
    %480 = arith.addf %477, %479 : vector<8x128xf32>
    %481 = vector.broadcast %209 : f32 to vector<8x128xf32>
    %482 = arith.addf %480, %481 : vector<8x128xf32>
    %cst_21 = arith.constant 0.000000e+00 : f32
    %483 = vector.broadcast %cst_21 : f32 to vector<8x128xf32>
    %484 = arith.maximumf %482, %483 : vector<8x128xf32>
    %485 = vector.broadcast %50 : f32 to vector<8x128xf32>
    %486 = arith.mulf %247, %485 : vector<8x128xf32>
    %487 = vector.broadcast %60 : f32 to vector<8x128xf32>
    %488 = arith.mulf %256, %487 : vector<8x128xf32>
    %489 = arith.addf %486, %488 : vector<8x128xf32>
    %490 = vector.broadcast %70 : f32 to vector<8x128xf32>
    %491 = arith.mulf %265, %490 : vector<8x128xf32>
    %492 = arith.addf %489, %491 : vector<8x128xf32>
    %493 = vector.broadcast %80 : f32 to vector<8x128xf32>
    %494 = arith.mulf %274, %493 : vector<8x128xf32>
    %495 = arith.addf %492, %494 : vector<8x128xf32>
    %496 = vector.broadcast %90 : f32 to vector<8x128xf32>
    %497 = arith.mulf %283, %496 : vector<8x128xf32>
    %498 = arith.addf %495, %497 : vector<8x128xf32>
    %499 = vector.broadcast %100 : f32 to vector<8x128xf32>
    %500 = arith.mulf %292, %499 : vector<8x128xf32>
    %501 = arith.addf %498, %500 : vector<8x128xf32>
    %502 = vector.broadcast %110 : f32 to vector<8x128xf32>
    %503 = arith.mulf %301, %502 : vector<8x128xf32>
    %504 = arith.addf %501, %503 : vector<8x128xf32>
    %505 = vector.broadcast %120 : f32 to vector<8x128xf32>
    %506 = arith.mulf %310, %505 : vector<8x128xf32>
    %507 = arith.addf %504, %506 : vector<8x128xf32>
    %508 = vector.broadcast %130 : f32 to vector<8x128xf32>
    %509 = arith.mulf %319, %508 : vector<8x128xf32>
    %510 = arith.addf %507, %509 : vector<8x128xf32>
    %511 = vector.broadcast %140 : f32 to vector<8x128xf32>
    %512 = arith.mulf %328, %511 : vector<8x128xf32>
    %513 = arith.addf %510, %512 : vector<8x128xf32>
    %514 = vector.broadcast %150 : f32 to vector<8x128xf32>
    %515 = arith.mulf %337, %514 : vector<8x128xf32>
    %516 = arith.addf %513, %515 : vector<8x128xf32>
    %517 = vector.broadcast %160 : f32 to vector<8x128xf32>
    %518 = arith.mulf %346, %517 : vector<8x128xf32>
    %519 = arith.addf %516, %518 : vector<8x128xf32>
    %520 = vector.broadcast %170 : f32 to vector<8x128xf32>
    %521 = arith.mulf %355, %520 : vector<8x128xf32>
    %522 = arith.addf %519, %521 : vector<8x128xf32>
    %523 = vector.broadcast %180 : f32 to vector<8x128xf32>
    %524 = arith.mulf %364, %523 : vector<8x128xf32>
    %525 = arith.addf %522, %524 : vector<8x128xf32>
    %526 = vector.broadcast %190 : f32 to vector<8x128xf32>
    %527 = arith.mulf %373, %526 : vector<8x128xf32>
    %528 = arith.addf %525, %527 : vector<8x128xf32>
    %529 = vector.broadcast %200 : f32 to vector<8x128xf32>
    %530 = arith.mulf %382, %529 : vector<8x128xf32>
    %531 = arith.addf %528, %530 : vector<8x128xf32>
    %532 = vector.broadcast %210 : f32 to vector<8x128xf32>
    %533 = arith.addf %531, %532 : vector<8x128xf32>
    %cst_22 = arith.constant 0.000000e+00 : f32
    %534 = vector.broadcast %cst_22 : f32 to vector<8x128xf32>
    %535 = arith.maximumf %533, %534 : vector<8x128xf32>
    %536 = vector.broadcast %51 : f32 to vector<8x128xf32>
    %537 = arith.mulf %247, %536 : vector<8x128xf32>
    %538 = vector.broadcast %61 : f32 to vector<8x128xf32>
    %539 = arith.mulf %256, %538 : vector<8x128xf32>
    %540 = arith.addf %537, %539 : vector<8x128xf32>
    %541 = vector.broadcast %71 : f32 to vector<8x128xf32>
    %542 = arith.mulf %265, %541 : vector<8x128xf32>
    %543 = arith.addf %540, %542 : vector<8x128xf32>
    %544 = vector.broadcast %81 : f32 to vector<8x128xf32>
    %545 = arith.mulf %274, %544 : vector<8x128xf32>
    %546 = arith.addf %543, %545 : vector<8x128xf32>
    %547 = vector.broadcast %91 : f32 to vector<8x128xf32>
    %548 = arith.mulf %283, %547 : vector<8x128xf32>
    %549 = arith.addf %546, %548 : vector<8x128xf32>
    %550 = vector.broadcast %101 : f32 to vector<8x128xf32>
    %551 = arith.mulf %292, %550 : vector<8x128xf32>
    %552 = arith.addf %549, %551 : vector<8x128xf32>
    %553 = vector.broadcast %111 : f32 to vector<8x128xf32>
    %554 = arith.mulf %301, %553 : vector<8x128xf32>
    %555 = arith.addf %552, %554 : vector<8x128xf32>
    %556 = vector.broadcast %121 : f32 to vector<8x128xf32>
    %557 = arith.mulf %310, %556 : vector<8x128xf32>
    %558 = arith.addf %555, %557 : vector<8x128xf32>
    %559 = vector.broadcast %131 : f32 to vector<8x128xf32>
    %560 = arith.mulf %319, %559 : vector<8x128xf32>
    %561 = arith.addf %558, %560 : vector<8x128xf32>
    %562 = vector.broadcast %141 : f32 to vector<8x128xf32>
    %563 = arith.mulf %328, %562 : vector<8x128xf32>
    %564 = arith.addf %561, %563 : vector<8x128xf32>
    %565 = vector.broadcast %151 : f32 to vector<8x128xf32>
    %566 = arith.mulf %337, %565 : vector<8x128xf32>
    %567 = arith.addf %564, %566 : vector<8x128xf32>
    %568 = vector.broadcast %161 : f32 to vector<8x128xf32>
    %569 = arith.mulf %346, %568 : vector<8x128xf32>
    %570 = arith.addf %567, %569 : vector<8x128xf32>
    %571 = vector.broadcast %171 : f32 to vector<8x128xf32>
    %572 = arith.mulf %355, %571 : vector<8x128xf32>
    %573 = arith.addf %570, %572 : vector<8x128xf32>
    %574 = vector.broadcast %181 : f32 to vector<8x128xf32>
    %575 = arith.mulf %364, %574 : vector<8x128xf32>
    %576 = arith.addf %573, %575 : vector<8x128xf32>
    %577 = vector.broadcast %191 : f32 to vector<8x128xf32>
    %578 = arith.mulf %373, %577 : vector<8x128xf32>
    %579 = arith.addf %576, %578 : vector<8x128xf32>
    %580 = vector.broadcast %201 : f32 to vector<8x128xf32>
    %581 = arith.mulf %382, %580 : vector<8x128xf32>
    %582 = arith.addf %579, %581 : vector<8x128xf32>
    %583 = vector.broadcast %211 : f32 to vector<8x128xf32>
    %584 = arith.addf %582, %583 : vector<8x128xf32>
    %cst_23 = arith.constant 0.000000e+00 : f32
    %585 = vector.broadcast %cst_23 : f32 to vector<8x128xf32>
    %586 = arith.maximumf %584, %585 : vector<8x128xf32>
    %587 = vector.broadcast %52 : f32 to vector<8x128xf32>
    %588 = arith.mulf %247, %587 : vector<8x128xf32>
    %589 = vector.broadcast %62 : f32 to vector<8x128xf32>
    %590 = arith.mulf %256, %589 : vector<8x128xf32>
    %591 = arith.addf %588, %590 : vector<8x128xf32>
    %592 = vector.broadcast %72 : f32 to vector<8x128xf32>
    %593 = arith.mulf %265, %592 : vector<8x128xf32>
    %594 = arith.addf %591, %593 : vector<8x128xf32>
    %595 = vector.broadcast %82 : f32 to vector<8x128xf32>
    %596 = arith.mulf %274, %595 : vector<8x128xf32>
    %597 = arith.addf %594, %596 : vector<8x128xf32>
    %598 = vector.broadcast %92 : f32 to vector<8x128xf32>
    %599 = arith.mulf %283, %598 : vector<8x128xf32>
    %600 = arith.addf %597, %599 : vector<8x128xf32>
    %601 = vector.broadcast %102 : f32 to vector<8x128xf32>
    %602 = arith.mulf %292, %601 : vector<8x128xf32>
    %603 = arith.addf %600, %602 : vector<8x128xf32>
    %604 = vector.broadcast %112 : f32 to vector<8x128xf32>
    %605 = arith.mulf %301, %604 : vector<8x128xf32>
    %606 = arith.addf %603, %605 : vector<8x128xf32>
    %607 = vector.broadcast %122 : f32 to vector<8x128xf32>
    %608 = arith.mulf %310, %607 : vector<8x128xf32>
    %609 = arith.addf %606, %608 : vector<8x128xf32>
    %610 = vector.broadcast %132 : f32 to vector<8x128xf32>
    %611 = arith.mulf %319, %610 : vector<8x128xf32>
    %612 = arith.addf %609, %611 : vector<8x128xf32>
    %613 = vector.broadcast %142 : f32 to vector<8x128xf32>
    %614 = arith.mulf %328, %613 : vector<8x128xf32>
    %615 = arith.addf %612, %614 : vector<8x128xf32>
    %616 = vector.broadcast %152 : f32 to vector<8x128xf32>
    %617 = arith.mulf %337, %616 : vector<8x128xf32>
    %618 = arith.addf %615, %617 : vector<8x128xf32>
    %619 = vector.broadcast %162 : f32 to vector<8x128xf32>
    %620 = arith.mulf %346, %619 : vector<8x128xf32>
    %621 = arith.addf %618, %620 : vector<8x128xf32>
    %622 = vector.broadcast %172 : f32 to vector<8x128xf32>
    %623 = arith.mulf %355, %622 : vector<8x128xf32>
    %624 = arith.addf %621, %623 : vector<8x128xf32>
    %625 = vector.broadcast %182 : f32 to vector<8x128xf32>
    %626 = arith.mulf %364, %625 : vector<8x128xf32>
    %627 = arith.addf %624, %626 : vector<8x128xf32>
    %628 = vector.broadcast %192 : f32 to vector<8x128xf32>
    %629 = arith.mulf %373, %628 : vector<8x128xf32>
    %630 = arith.addf %627, %629 : vector<8x128xf32>
    %631 = vector.broadcast %202 : f32 to vector<8x128xf32>
    %632 = arith.mulf %382, %631 : vector<8x128xf32>
    %633 = arith.addf %630, %632 : vector<8x128xf32>
    %634 = vector.broadcast %212 : f32 to vector<8x128xf32>
    %635 = arith.addf %633, %634 : vector<8x128xf32>
    %cst_24 = arith.constant 0.000000e+00 : f32
    %636 = vector.broadcast %cst_24 : f32 to vector<8x128xf32>
    %637 = arith.maximumf %635, %636 : vector<8x128xf32>
    %638 = vector.broadcast %53 : f32 to vector<8x128xf32>
    %639 = arith.mulf %247, %638 : vector<8x128xf32>
    %640 = vector.broadcast %63 : f32 to vector<8x128xf32>
    %641 = arith.mulf %256, %640 : vector<8x128xf32>
    %642 = arith.addf %639, %641 : vector<8x128xf32>
    %643 = vector.broadcast %73 : f32 to vector<8x128xf32>
    %644 = arith.mulf %265, %643 : vector<8x128xf32>
    %645 = arith.addf %642, %644 : vector<8x128xf32>
    %646 = vector.broadcast %83 : f32 to vector<8x128xf32>
    %647 = arith.mulf %274, %646 : vector<8x128xf32>
    %648 = arith.addf %645, %647 : vector<8x128xf32>
    %649 = vector.broadcast %93 : f32 to vector<8x128xf32>
    %650 = arith.mulf %283, %649 : vector<8x128xf32>
    %651 = arith.addf %648, %650 : vector<8x128xf32>
    %652 = vector.broadcast %103 : f32 to vector<8x128xf32>
    %653 = arith.mulf %292, %652 : vector<8x128xf32>
    %654 = arith.addf %651, %653 : vector<8x128xf32>
    %655 = vector.broadcast %113 : f32 to vector<8x128xf32>
    %656 = arith.mulf %301, %655 : vector<8x128xf32>
    %657 = arith.addf %654, %656 : vector<8x128xf32>
    %658 = vector.broadcast %123 : f32 to vector<8x128xf32>
    %659 = arith.mulf %310, %658 : vector<8x128xf32>
    %660 = arith.addf %657, %659 : vector<8x128xf32>
    %661 = vector.broadcast %133 : f32 to vector<8x128xf32>
    %662 = arith.mulf %319, %661 : vector<8x128xf32>
    %663 = arith.addf %660, %662 : vector<8x128xf32>
    %664 = vector.broadcast %143 : f32 to vector<8x128xf32>
    %665 = arith.mulf %328, %664 : vector<8x128xf32>
    %666 = arith.addf %663, %665 : vector<8x128xf32>
    %667 = vector.broadcast %153 : f32 to vector<8x128xf32>
    %668 = arith.mulf %337, %667 : vector<8x128xf32>
    %669 = arith.addf %666, %668 : vector<8x128xf32>
    %670 = vector.broadcast %163 : f32 to vector<8x128xf32>
    %671 = arith.mulf %346, %670 : vector<8x128xf32>
    %672 = arith.addf %669, %671 : vector<8x128xf32>
    %673 = vector.broadcast %173 : f32 to vector<8x128xf32>
    %674 = arith.mulf %355, %673 : vector<8x128xf32>
    %675 = arith.addf %672, %674 : vector<8x128xf32>
    %676 = vector.broadcast %183 : f32 to vector<8x128xf32>
    %677 = arith.mulf %364, %676 : vector<8x128xf32>
    %678 = arith.addf %675, %677 : vector<8x128xf32>
    %679 = vector.broadcast %193 : f32 to vector<8x128xf32>
    %680 = arith.mulf %373, %679 : vector<8x128xf32>
    %681 = arith.addf %678, %680 : vector<8x128xf32>
    %682 = vector.broadcast %203 : f32 to vector<8x128xf32>
    %683 = arith.mulf %382, %682 : vector<8x128xf32>
    %684 = arith.addf %681, %683 : vector<8x128xf32>
    %685 = vector.broadcast %213 : f32 to vector<8x128xf32>
    %686 = arith.addf %684, %685 : vector<8x128xf32>
    %cst_25 = arith.constant 0.000000e+00 : f32
    %687 = vector.broadcast %cst_25 : f32 to vector<8x128xf32>
    %688 = arith.maximumf %686, %687 : vector<8x128xf32>
    %689 = vector.broadcast %54 : f32 to vector<8x128xf32>
    %690 = arith.mulf %247, %689 : vector<8x128xf32>
    %691 = vector.broadcast %64 : f32 to vector<8x128xf32>
    %692 = arith.mulf %256, %691 : vector<8x128xf32>
    %693 = arith.addf %690, %692 : vector<8x128xf32>
    %694 = vector.broadcast %74 : f32 to vector<8x128xf32>
    %695 = arith.mulf %265, %694 : vector<8x128xf32>
    %696 = arith.addf %693, %695 : vector<8x128xf32>
    %697 = vector.broadcast %84 : f32 to vector<8x128xf32>
    %698 = arith.mulf %274, %697 : vector<8x128xf32>
    %699 = arith.addf %696, %698 : vector<8x128xf32>
    %700 = vector.broadcast %94 : f32 to vector<8x128xf32>
    %701 = arith.mulf %283, %700 : vector<8x128xf32>
    %702 = arith.addf %699, %701 : vector<8x128xf32>
    %703 = vector.broadcast %104 : f32 to vector<8x128xf32>
    %704 = arith.mulf %292, %703 : vector<8x128xf32>
    %705 = arith.addf %702, %704 : vector<8x128xf32>
    %706 = vector.broadcast %114 : f32 to vector<8x128xf32>
    %707 = arith.mulf %301, %706 : vector<8x128xf32>
    %708 = arith.addf %705, %707 : vector<8x128xf32>
    %709 = vector.broadcast %124 : f32 to vector<8x128xf32>
    %710 = arith.mulf %310, %709 : vector<8x128xf32>
    %711 = arith.addf %708, %710 : vector<8x128xf32>
    %712 = vector.broadcast %134 : f32 to vector<8x128xf32>
    %713 = arith.mulf %319, %712 : vector<8x128xf32>
    %714 = arith.addf %711, %713 : vector<8x128xf32>
    %715 = vector.broadcast %144 : f32 to vector<8x128xf32>
    %716 = arith.mulf %328, %715 : vector<8x128xf32>
    %717 = arith.addf %714, %716 : vector<8x128xf32>
    %718 = vector.broadcast %154 : f32 to vector<8x128xf32>
    %719 = arith.mulf %337, %718 : vector<8x128xf32>
    %720 = arith.addf %717, %719 : vector<8x128xf32>
    %721 = vector.broadcast %164 : f32 to vector<8x128xf32>
    %722 = arith.mulf %346, %721 : vector<8x128xf32>
    %723 = arith.addf %720, %722 : vector<8x128xf32>
    %724 = vector.broadcast %174 : f32 to vector<8x128xf32>
    %725 = arith.mulf %355, %724 : vector<8x128xf32>
    %726 = arith.addf %723, %725 : vector<8x128xf32>
    %727 = vector.broadcast %184 : f32 to vector<8x128xf32>
    %728 = arith.mulf %364, %727 : vector<8x128xf32>
    %729 = arith.addf %726, %728 : vector<8x128xf32>
    %730 = vector.broadcast %194 : f32 to vector<8x128xf32>
    %731 = arith.mulf %373, %730 : vector<8x128xf32>
    %732 = arith.addf %729, %731 : vector<8x128xf32>
    %733 = vector.broadcast %204 : f32 to vector<8x128xf32>
    %734 = arith.mulf %382, %733 : vector<8x128xf32>
    %735 = arith.addf %732, %734 : vector<8x128xf32>
    %736 = vector.broadcast %214 : f32 to vector<8x128xf32>
    %737 = arith.addf %735, %736 : vector<8x128xf32>
    %cst_26 = arith.constant 0.000000e+00 : f32
    %738 = vector.broadcast %cst_26 : f32 to vector<8x128xf32>
    %739 = arith.maximumf %737, %738 : vector<8x128xf32>
    %740 = vector.broadcast %55 : f32 to vector<8x128xf32>
    %741 = arith.mulf %247, %740 : vector<8x128xf32>
    %742 = vector.broadcast %65 : f32 to vector<8x128xf32>
    %743 = arith.mulf %256, %742 : vector<8x128xf32>
    %744 = arith.addf %741, %743 : vector<8x128xf32>
    %745 = vector.broadcast %75 : f32 to vector<8x128xf32>
    %746 = arith.mulf %265, %745 : vector<8x128xf32>
    %747 = arith.addf %744, %746 : vector<8x128xf32>
    %748 = vector.broadcast %85 : f32 to vector<8x128xf32>
    %749 = arith.mulf %274, %748 : vector<8x128xf32>
    %750 = arith.addf %747, %749 : vector<8x128xf32>
    %751 = vector.broadcast %95 : f32 to vector<8x128xf32>
    %752 = arith.mulf %283, %751 : vector<8x128xf32>
    %753 = arith.addf %750, %752 : vector<8x128xf32>
    %754 = vector.broadcast %105 : f32 to vector<8x128xf32>
    %755 = arith.mulf %292, %754 : vector<8x128xf32>
    %756 = arith.addf %753, %755 : vector<8x128xf32>
    %757 = vector.broadcast %115 : f32 to vector<8x128xf32>
    %758 = arith.mulf %301, %757 : vector<8x128xf32>
    %759 = arith.addf %756, %758 : vector<8x128xf32>
    %760 = vector.broadcast %125 : f32 to vector<8x128xf32>
    %761 = arith.mulf %310, %760 : vector<8x128xf32>
    %762 = arith.addf %759, %761 : vector<8x128xf32>
    %763 = vector.broadcast %135 : f32 to vector<8x128xf32>
    %764 = arith.mulf %319, %763 : vector<8x128xf32>
    %765 = arith.addf %762, %764 : vector<8x128xf32>
    %766 = vector.broadcast %145 : f32 to vector<8x128xf32>
    %767 = arith.mulf %328, %766 : vector<8x128xf32>
    %768 = arith.addf %765, %767 : vector<8x128xf32>
    %769 = vector.broadcast %155 : f32 to vector<8x128xf32>
    %770 = arith.mulf %337, %769 : vector<8x128xf32>
    %771 = arith.addf %768, %770 : vector<8x128xf32>
    %772 = vector.broadcast %165 : f32 to vector<8x128xf32>
    %773 = arith.mulf %346, %772 : vector<8x128xf32>
    %774 = arith.addf %771, %773 : vector<8x128xf32>
    %775 = vector.broadcast %175 : f32 to vector<8x128xf32>
    %776 = arith.mulf %355, %775 : vector<8x128xf32>
    %777 = arith.addf %774, %776 : vector<8x128xf32>
    %778 = vector.broadcast %185 : f32 to vector<8x128xf32>
    %779 = arith.mulf %364, %778 : vector<8x128xf32>
    %780 = arith.addf %777, %779 : vector<8x128xf32>
    %781 = vector.broadcast %195 : f32 to vector<8x128xf32>
    %782 = arith.mulf %373, %781 : vector<8x128xf32>
    %783 = arith.addf %780, %782 : vector<8x128xf32>
    %784 = vector.broadcast %205 : f32 to vector<8x128xf32>
    %785 = arith.mulf %382, %784 : vector<8x128xf32>
    %786 = arith.addf %783, %785 : vector<8x128xf32>
    %787 = vector.broadcast %215 : f32 to vector<8x128xf32>
    %788 = arith.addf %786, %787 : vector<8x128xf32>
    %cst_27 = arith.constant 0.000000e+00 : f32
    %789 = vector.broadcast %cst_27 : f32 to vector<8x128xf32>
    %790 = arith.maximumf %788, %789 : vector<8x128xf32>
    %791 = vector.broadcast %56 : f32 to vector<8x128xf32>
    %792 = arith.mulf %247, %791 : vector<8x128xf32>
    %793 = vector.broadcast %66 : f32 to vector<8x128xf32>
    %794 = arith.mulf %256, %793 : vector<8x128xf32>
    %795 = arith.addf %792, %794 : vector<8x128xf32>
    %796 = vector.broadcast %76 : f32 to vector<8x128xf32>
    %797 = arith.mulf %265, %796 : vector<8x128xf32>
    %798 = arith.addf %795, %797 : vector<8x128xf32>
    %799 = vector.broadcast %86 : f32 to vector<8x128xf32>
    %800 = arith.mulf %274, %799 : vector<8x128xf32>
    %801 = arith.addf %798, %800 : vector<8x128xf32>
    %802 = vector.broadcast %96 : f32 to vector<8x128xf32>
    %803 = arith.mulf %283, %802 : vector<8x128xf32>
    %804 = arith.addf %801, %803 : vector<8x128xf32>
    %805 = vector.broadcast %106 : f32 to vector<8x128xf32>
    %806 = arith.mulf %292, %805 : vector<8x128xf32>
    %807 = arith.addf %804, %806 : vector<8x128xf32>
    %808 = vector.broadcast %116 : f32 to vector<8x128xf32>
    %809 = arith.mulf %301, %808 : vector<8x128xf32>
    %810 = arith.addf %807, %809 : vector<8x128xf32>
    %811 = vector.broadcast %126 : f32 to vector<8x128xf32>
    %812 = arith.mulf %310, %811 : vector<8x128xf32>
    %813 = arith.addf %810, %812 : vector<8x128xf32>
    %814 = vector.broadcast %136 : f32 to vector<8x128xf32>
    %815 = arith.mulf %319, %814 : vector<8x128xf32>
    %816 = arith.addf %813, %815 : vector<8x128xf32>
    %817 = vector.broadcast %146 : f32 to vector<8x128xf32>
    %818 = arith.mulf %328, %817 : vector<8x128xf32>
    %819 = arith.addf %816, %818 : vector<8x128xf32>
    %820 = vector.broadcast %156 : f32 to vector<8x128xf32>
    %821 = arith.mulf %337, %820 : vector<8x128xf32>
    %822 = arith.addf %819, %821 : vector<8x128xf32>
    %823 = vector.broadcast %166 : f32 to vector<8x128xf32>
    %824 = arith.mulf %346, %823 : vector<8x128xf32>
    %825 = arith.addf %822, %824 : vector<8x128xf32>
    %826 = vector.broadcast %176 : f32 to vector<8x128xf32>
    %827 = arith.mulf %355, %826 : vector<8x128xf32>
    %828 = arith.addf %825, %827 : vector<8x128xf32>
    %829 = vector.broadcast %186 : f32 to vector<8x128xf32>
    %830 = arith.mulf %364, %829 : vector<8x128xf32>
    %831 = arith.addf %828, %830 : vector<8x128xf32>
    %832 = vector.broadcast %196 : f32 to vector<8x128xf32>
    %833 = arith.mulf %373, %832 : vector<8x128xf32>
    %834 = arith.addf %831, %833 : vector<8x128xf32>
    %835 = vector.broadcast %206 : f32 to vector<8x128xf32>
    %836 = arith.mulf %382, %835 : vector<8x128xf32>
    %837 = arith.addf %834, %836 : vector<8x128xf32>
    %838 = vector.broadcast %216 : f32 to vector<8x128xf32>
    %839 = arith.addf %837, %838 : vector<8x128xf32>
    %cst_28 = arith.constant 0.000000e+00 : f32
    %840 = vector.broadcast %cst_28 : f32 to vector<8x128xf32>
    %841 = arith.maximumf %839, %840 : vector<8x128xf32>
    %842 = vector.broadcast %57 : f32 to vector<8x128xf32>
    %843 = arith.mulf %247, %842 : vector<8x128xf32>
    %844 = vector.broadcast %67 : f32 to vector<8x128xf32>
    %845 = arith.mulf %256, %844 : vector<8x128xf32>
    %846 = arith.addf %843, %845 : vector<8x128xf32>
    %847 = vector.broadcast %77 : f32 to vector<8x128xf32>
    %848 = arith.mulf %265, %847 : vector<8x128xf32>
    %849 = arith.addf %846, %848 : vector<8x128xf32>
    %850 = vector.broadcast %87 : f32 to vector<8x128xf32>
    %851 = arith.mulf %274, %850 : vector<8x128xf32>
    %852 = arith.addf %849, %851 : vector<8x128xf32>
    %853 = vector.broadcast %97 : f32 to vector<8x128xf32>
    %854 = arith.mulf %283, %853 : vector<8x128xf32>
    %855 = arith.addf %852, %854 : vector<8x128xf32>
    %856 = vector.broadcast %107 : f32 to vector<8x128xf32>
    %857 = arith.mulf %292, %856 : vector<8x128xf32>
    %858 = arith.addf %855, %857 : vector<8x128xf32>
    %859 = vector.broadcast %117 : f32 to vector<8x128xf32>
    %860 = arith.mulf %301, %859 : vector<8x128xf32>
    %861 = arith.addf %858, %860 : vector<8x128xf32>
    %862 = vector.broadcast %127 : f32 to vector<8x128xf32>
    %863 = arith.mulf %310, %862 : vector<8x128xf32>
    %864 = arith.addf %861, %863 : vector<8x128xf32>
    %865 = vector.broadcast %137 : f32 to vector<8x128xf32>
    %866 = arith.mulf %319, %865 : vector<8x128xf32>
    %867 = arith.addf %864, %866 : vector<8x128xf32>
    %868 = vector.broadcast %147 : f32 to vector<8x128xf32>
    %869 = arith.mulf %328, %868 : vector<8x128xf32>
    %870 = arith.addf %867, %869 : vector<8x128xf32>
    %871 = vector.broadcast %157 : f32 to vector<8x128xf32>
    %872 = arith.mulf %337, %871 : vector<8x128xf32>
    %873 = arith.addf %870, %872 : vector<8x128xf32>
    %874 = vector.broadcast %167 : f32 to vector<8x128xf32>
    %875 = arith.mulf %346, %874 : vector<8x128xf32>
    %876 = arith.addf %873, %875 : vector<8x128xf32>
    %877 = vector.broadcast %177 : f32 to vector<8x128xf32>
    %878 = arith.mulf %355, %877 : vector<8x128xf32>
    %879 = arith.addf %876, %878 : vector<8x128xf32>
    %880 = vector.broadcast %187 : f32 to vector<8x128xf32>
    %881 = arith.mulf %364, %880 : vector<8x128xf32>
    %882 = arith.addf %879, %881 : vector<8x128xf32>
    %883 = vector.broadcast %197 : f32 to vector<8x128xf32>
    %884 = arith.mulf %373, %883 : vector<8x128xf32>
    %885 = arith.addf %882, %884 : vector<8x128xf32>
    %886 = vector.broadcast %207 : f32 to vector<8x128xf32>
    %887 = arith.mulf %382, %886 : vector<8x128xf32>
    %888 = arith.addf %885, %887 : vector<8x128xf32>
    %889 = vector.broadcast %217 : f32 to vector<8x128xf32>
    %890 = arith.addf %888, %889 : vector<8x128xf32>
    %cst_29 = arith.constant 0.000000e+00 : f32
    %891 = vector.broadcast %cst_29 : f32 to vector<8x128xf32>
    %892 = arith.maximumf %890, %891 : vector<8x128xf32>
    %893 = vector.broadcast %218 : f32 to vector<8x128xf32>
    %894 = arith.mulf %433, %893 : vector<8x128xf32>
    %895 = vector.broadcast %219 : f32 to vector<8x128xf32>
    %896 = arith.mulf %484, %895 : vector<8x128xf32>
    %897 = arith.addf %894, %896 : vector<8x128xf32>
    %898 = vector.broadcast %220 : f32 to vector<8x128xf32>
    %899 = arith.mulf %535, %898 : vector<8x128xf32>
    %900 = arith.addf %897, %899 : vector<8x128xf32>
    %901 = vector.broadcast %221 : f32 to vector<8x128xf32>
    %902 = arith.mulf %586, %901 : vector<8x128xf32>
    %903 = arith.addf %900, %902 : vector<8x128xf32>
    %904 = vector.broadcast %222 : f32 to vector<8x128xf32>
    %905 = arith.mulf %637, %904 : vector<8x128xf32>
    %906 = arith.addf %903, %905 : vector<8x128xf32>
    %907 = vector.broadcast %223 : f32 to vector<8x128xf32>
    %908 = arith.mulf %688, %907 : vector<8x128xf32>
    %909 = arith.addf %906, %908 : vector<8x128xf32>
    %910 = vector.broadcast %224 : f32 to vector<8x128xf32>
    %911 = arith.mulf %739, %910 : vector<8x128xf32>
    %912 = arith.addf %909, %911 : vector<8x128xf32>
    %913 = vector.broadcast %225 : f32 to vector<8x128xf32>
    %914 = arith.mulf %790, %913 : vector<8x128xf32>
    %915 = arith.addf %912, %914 : vector<8x128xf32>
    %916 = vector.broadcast %226 : f32 to vector<8x128xf32>
    %917 = arith.mulf %841, %916 : vector<8x128xf32>
    %918 = arith.addf %915, %917 : vector<8x128xf32>
    %919 = vector.broadcast %227 : f32 to vector<8x128xf32>
    %920 = arith.mulf %892, %919 : vector<8x128xf32>
    %921 = arith.addf %918, %920 : vector<8x128xf32>
    %922 = vector.broadcast %228 : f32 to vector<8x128xf32>
    %923 = arith.addf %921, %922 : vector<8x128xf32>
    %c0_30 = arith.constant 0 : index
    %924 = arith.index_cast %232 : i32 to index
    %c0_31 = arith.constant 0 : index
    %925 = vector.load %arg3[%c0_30, %924, %c0_31] : memref<1x8x128xf32, #tpu.memory_space<vmem>>, vector<1x8x128xf32>
    %926 = vector.shape_cast %925 : vector<1x8x128xf32> to vector<8x128xf32>
    %927 = vector.shape_cast %923 : vector<8x128xf32> to vector<1x8x128xf32>
    tpu.vector_store %arg3[%c0_30, %924, %c0_31], %927 {strides = array<i32>} : memref<1x8x128xf32, #tpu.memory_space<vmem>>, vector<1x8x128xf32>,
    %c1_i32_32 = arith.constant 1 : i32
    return
  }
  func.func @transform_0(%arg0: i32) -> i32 {
    %c0_i32 = arith.constant 0 : i32
    %c0_i32_0 = arith.constant 0 : i32
    return %c0_i32 : i32
  }
  func.func @transform_1(%arg0: i32) -> (i32, i32, i32) {
    %c0_i32 = arith.constant 0 : i32
    %c0_i32_0 = arith.constant 0 : i32
    %c0_i32_1 = arith.constant 0 : i32
    return %c0_i32, %arg0, %c0_i32_0 : i32, i32, i32
  }
  func.func @transform_2(%arg0: i32) -> (i32, i32, i32) {
    %c0_i32 = arith.constant 0 : i32
    %c0_i32_0 = arith.constant 0 : i32
    %c0_i32_1 = arith.constant 0 : i32
    return %c0_i32, %arg0, %c0_i32_0 : i32, i32, i32
  }
}

</mosaic_0001>

<llo_original>
// kernel: tpu_custom_call.1
$region0: #{tpu_custom_call.1}
  #allocation0 [shape = 'u32[]', space=smem, size = 0x4, offset = 0x4, fixed_abs, tag = 'smem constant byte address 0x4 - core index']
  #allocation1 [shape = 'u32[72,128]{1,0:T(1,128)}', space=vmem, size = 0x9000, scoped, tag = 'internal scratch']
  %s0 = inlined_call_operand.hbm [shape: f32[229], index: 0, kind: input, shape index: {}]
  %s1 = inlined_call_operand.hbm [shape: f32[2,8,128], index: 1, kind: input, shape index: {}]
  %s2 = inlined_call_operand.hbm [shape: f32[1,8,128], index: 2, kind: output, shape index: {}]
  %s3 = sld [smem:[#allocation0]]
  $region26: #{tpu_custom_call.1} parent=0
    _
  %s5 = ssub.s32 1, %s3
  %s6 = scalar_select 0, %s5, %s3
  $region1: #{tpu_custom_call.1} parent=0
    #allocation2 [shape = 'u8[1024]{0}', space=smem, size = 0x400, scoped, tag = 'input window, operand 0, single buffered']
    #allocation3 [shape = 's32[1]{0}', space=sflag, size = 0x4, scoped, tag = 'scoped memory for tpu_custom_call.1']
    #allocation4 [shape = 's32[1]{0}', space=sflag, size = 0x4, scoped, tag = 'scoped memory for tpu_custom_call.1']
    #allocation5 [shape = 's32[1]{0}', space=sflag, size = 0x4, scoped, tag = 'scoped memory for tpu_custom_call.1']
    #allocation6 [shape = 'u8[8192]{0}', space=vmem, size = 0x2000, scoped, tag = 'input window, operand 1, single buffered']
    #allocation7 [shape = 'u8[4096]{0}', space=vmem, size = 0x1000, scoped, tag = 'output window, operand 0, single buffered']
    %7 = vsyncpa [#allocation5], 0
    %8 = vsyncpa [#allocation3], 0
    %9 = vsyncpa [#allocation4], 0
    // Predicated region
    $region2: #{tpu_custom_call.1} parent=1 // pred_check
      _
    $region3: #{tpu_custom_call.1} parent=1 // pred_check_branch
      %11 = sbr.rel (0) target = $region5
    $region4: #{tpu_custom_call.1} parent=1 // pred_region
      %13 = vsyncadd [#allocation5], 0
      %s15 = sshll.u32 %s0, 4
      %s16 = int_to_ptr.hbm [resolvable:$true] %s15
      %18 = dma.hbm_to_smem %s16, 32, [#allocation2], [#allocation5]
    $region5: #{tpu_custom_call.1} parent=1 // pred_fallthru
      _
    // Predicated region
    $region6: #{tpu_custom_call.1} parent=1 // pred_check
      _
    $region7: #{tpu_custom_call.1} parent=1 // pred_check_branch
      %20 = sbr.rel (0) target = $region9
    $region8: #{tpu_custom_call.1} parent=1 // pred_region
      %22 = vsyncadd [#allocation3], 0
      %s23 = sshll.u32 %s1, 4
      %s24 = int_to_ptr.hbm [resolvable:$true] %s23
      %s25 = sshll.u32 [#allocation6], 4
      %s26 = int_to_ptr.vmem [resolvable:$true] %s25
      %31 = dma.hbm_to_vmem [thread:$0]  %s24, 256, %s26, [#allocation3], 128, 128, 8
    $region9: #{tpu_custom_call.1} parent=1 // pred_fallthru
      _
    // Predicated region
    $region10: #{tpu_custom_call.1} parent=1 // pred_check
      _
    $region11: #{tpu_custom_call.1} parent=1 // pred_check_branch
      %33 = sbr.rel (0) target = $region13
    $region12: #{tpu_custom_call.1} parent=1 // pred_region
      %35 = dma.done [#allocation5], 32
    $region13: #{tpu_custom_call.1} parent=1 // pred_fallthru
      _
    // Predicated region
    $region14: #{tpu_custom_call.1} parent=1 // pred_check
      _
    $region15: #{tpu_custom_call.1} parent=1 // pred_check_branch
      %37 = sbr.rel (0) target = $region17
    $region16: #{tpu_custom_call.1} parent=1 // pred_region
      %39 = dma.done [#allocation3], 256
    $region17: #{tpu_custom_call.1} parent=1 // pred_fallthru
      _
    %40 = sfence
    %s41 = sld [smem:[#allocation2]]
    %s42 = sld [smem:[#allocation2 + $0x1]]
    %s43 = sld [smem:[#allocation2 + $0x2]]
    %s44 = sld [smem:[#allocation2 + $0x3]]
    %s45 = sld [smem:[#allocation2 + $0x4]]
    %s46 = sld [smem:[#allocation2 + $0x5]]
    %s47 = sld [smem:[#allocation2 + $0x6]]
    %s48 = sld [smem:[#allocation2 + $0x7]]
    %s49 = sld [smem:[#allocation2 + $0x8]]
    %s50 = sld [smem:[#allocation2 + $0x9]]
    %s51 = sld [smem:[#allocation2 + $0xa]]
    %s52 = sld [smem:[#allocation2 + $0xb]]
    %s53 = sld [smem:[#allocation2 + $0xc]]
    %s54 = sld [smem:[#allocation2 + $0xd]]
    %s55 = sld [smem:[#allocation2 + $0xe]]
    %s56 = sld [smem:[#allocation2 + $0xf]]
    %s57 = sld [smem:[#allocation2 + $0x10]]
    %s58 = sld [smem:[#allocation2 + $0x11]]
    %s59 = sld [smem:[#allocation2 + $0x12]]
    %s60 = sld [smem:[#allocation2 + $0x13]]
    %s61 = sld [smem:[#allocation2 + $0x14]]
    %s62 = sld [smem:[#allocation2 + $0x15]]
    %s63 = sld [smem:[#allocation2 + $0x16]]
    %s64 = sld [smem:[#allocation2 + $0x17]]
    %s65 = sld [smem:[#allocation2 + $0x18]]
    %s66 = sld [smem:[#allocation2 + $0x19]]
    %s67 = sld [smem:[#allocation2 + $0x1a]]
    %s68 = sld [smem:[#allocation2 + $0x1b]]
    %s69 = sld [smem:[#allocation2 + $0x1c]]
    %s70 = sld [smem:[#allocation2 + $0x1d]]
    %s71 = sld [smem:[#allocation2 + $0x1e]]
    %s72 = sld [smem:[#allocation2 + $0x1f]]
    %s73 = sld [smem:[#allocation2 + $0x20]]
    %s74 = sld [smem:[#allocation2 + $0x21]]
    %s75 = sld [smem:[#allocation2 + $0x22]]
    %s76 = sld [smem:[#allocation2 + $0x23]]
    %s77 = sld [smem:[#allocation2 + $0x24]]
    %s78 = sld [smem:[#allocation2 + $0x25]]
    %s79 = sld [smem:[#allocation2 + $0x26]]
    %s80 = sld [smem:[#allocation2 + $0x27]]
    %s81 = sld [smem:[#allocation2 + $0x28]]
    %s82 = sld [smem:[#allocation2 + $0x29]]
    %s83 = sld [smem:[#allocation2 + $0x2a]]
    %s84 = sld [smem:[#allocation2 + $0x2b]]
    %s85 = sld [smem:[#allocation2 + $0x2c]]
    %s86 = sld [smem:[#allocation2 + $0x2d]]
    %s87 = sld [smem:[#allocation2 + $0x2e]]
    %s88 = sld [smem:[#allocation2 + $0x2f]]
    %s89 = sld [smem:[#allocation2 + $0x30]]
    %s90 = sld [smem:[#allocation2 + $0x31]]
    %s91 = sld [smem:[#allocation2 + $0x32]]
    %s92 = sld [smem:[#allocation2 + $0x33]]
    %s93 = sld [smem:[#allocation2 + $0x34]]
    %s94 = sld [smem:[#allocation2 + $0x35]]
    %s95 = sld [smem:[#allocation2 + $0x36]]
    %s96 = sld [smem:[#allocation2 + $0x37]]
    %s97 = sld [smem:[#allocation2 + $0x38]]
    %s98 = sld [smem:[#allocation2 + $0x39]]
    %s99 = sld [smem:[#allocation2 + $0x3a]]
    %s100 = sld [smem:[#allocation2 + $0x3b]]
    %s101 = sld [smem:[#allocation2 + $0x3c]]
    %s102 = sld [smem:[#allocation2 + $0x3d]]
    %s103 = sld [smem:[#allocation2 + $0x3e]]
    %s104 = sld [smem:[#allocation2 + $0x3f]]
    %s105 = sld [smem:[#allocation2 + $0x40]]
    %s106 = sld [smem:[#allocation2 + $0x41]]
    %s107 = sld [smem:[#allocation2 + $0x42]]
    %s108 = sld [smem:[#allocation2 + $0x43]]
    %s109 = sld [smem:[#allocation2 + $0x44]]
    %s110 = sld [smem:[#allocation2 + $0x45]]
    %s111 = sld [smem:[#allocation2 + $0x46]]
    %s112 = sld [smem:[#allocation2 + $0x47]]
    %s113 = sld [smem:[#allocation2 + $0x48]]
    %s114 = sld [smem:[#allocation2 + $0x49]]
    %s115 = sld [smem:[#allocation2 + $0x4a]]
    %s116 = sld [smem:[#allocation2 + $0x4b]]
    %s117 = sld [smem:[#allocation2 + $0x4c]]
    %s118 = sld [smem:[#allocation2 + $0x4d]]
    %s119 = sld [smem:[#allocation2 + $0x4e]]
    %s120 = sld [smem:[#allocation2 + $0x4f]]
    %s121 = sld [smem:[#allocation2 + $0x50]]
    %s122 = sld [smem:[#allocation2 + $0x51]]
    %s123 = sld [smem:[#allocation2 + $0x52]]
    %s124 = sld [smem:[#allocation2 + $0x53]]
    %s125 = sld [smem:[#allocation2 + $0x54]]
    %s126 = sld [smem:[#allocation2 + $0x55]]
    %s127 = sld [smem:[#allocation2 + $0x56]]
    %s128 = sld [smem:[#allocation2 + $0x57]]
    %s129 = sld [smem:[#allocation2 + $0x58]]
    %s130 = sld [smem:[#allocation2 + $0x59]]
    %s131 = sld [smem:[#allocation2 + $0x5a]]
    %s132 = sld [smem:[#allocation2 + $0x5b]]
    %s133 = sld [smem:[#allocation2 + $0x5c]]
    %s134 = sld [smem:[#allocation2 + $0x5d]]
    %s135 = sld [smem:[#allocation2 + $0x5e]]
    %s136 = sld [smem:[#allocation2 + $0x5f]]
    %s137 = sld [smem:[#allocation2 + $0x60]]
    %s138 = sld [smem:[#allocation2 + $0x61]]
    %s139 = sld [smem:[#allocation2 + $0x62]]
    %s140 = sld [smem:[#allocation2 + $0x63]]
    %s141 = sld [smem:[#allocation2 + $0x64]]
    %s142 = sld [smem:[#allocation2 + $0x65]]
    %s143 = sld [smem:[#allocation2 + $0x66]]
    %s144 = sld [smem:[#allocation2 + $0x67]]
    %s145 = sld [smem:[#allocation2 + $0x68]]
    %s146 = sld [smem:[#allocation2 + $0x69]]
    %s147 = sld [smem:[#allocation2 + $0x6a]]
    %s148 = sld [smem:[#allocation2 + $0x6b]]
    %s149 = sld [smem:[#allocation2 + $0x6c]]
    %s150 = sld [smem:[#allocation2 + $0x6d]]
    %s151 = sld [smem:[#allocation2 + $0x6e]]
    %s152 = sld [smem:[#allocation2 + $0x6f]]
    %s153 = sld [smem:[#allocation2 + $0x70]]
    %s154 = sld [smem:[#allocation2 + $0x71]]
    %s155 = sld [smem:[#allocation2 + $0x72]]
    %s156 = sld [smem:[#allocation2 + $0x73]]
    %s157 = sld [smem:[#allocation2 + $0x74]]
    %s158 = sld [smem:[#allocation2 + $0x75]]
    %s159 = sld [smem:[#allocation2 + $0x76]]
    %s160 = sld [smem:[#allocation2 + $0x77]]
    %s161 = sld [smem:[#allocation2 + $0x78]]
    %s162 = sld [smem:[#allocation2 + $0x79]]
    %s163 = sld [smem:[#allocation2 + $0x7a]]
    %s164 = sld [smem:[#allocation2 + $0x7b]]
    %s165 = sld [smem:[#allocation2 + $0x7c]]
    %s166 = sld [smem:[#allocation2 + $0x7d]]
    %s167 = sld [smem:[#allocation2 + $0x7e]]
    %s168 = sld [smem:[#allocation2 + $0x7f]]
    %s169 = sld [smem:[#allocation2 + $0x80]]
    %s170 = sld [smem:[#allocation2 + $0x81]]
    %s171 = sld [smem:[#allocation2 + $0x82]]
    %s172 = sld [smem:[#allocation2 + $0x83]]
    %s173 = sld [smem:[#allocation2 + $0x84]]
    %s174 = sld [smem:[#allocation2 + $0x85]]
    %s175 = sld [smem:[#allocation2 + $0x86]]
    %s176 = sld [smem:[#allocation2 + $0x87]]
    %s177 = sld [smem:[#allocation2 + $0x88]]
    %s178 = sld [smem:[#allocation2 + $0x89]]
    %s179 = sld [smem:[#allocation2 + $0x8a]]
    %s180 = sld [smem:[#allocation2 + $0x8b]]
    %s181 = sld [smem:[#allocation2 + $0x8c]]
    %s182 = sld [smem:[#allocation2 + $0x8d]]
    %s183 = sld [smem:[#allocation2 + $0x8e]]
    %s184 = sld [smem:[#allocation2 + $0x8f]]
    %s185 = sld [smem:[#allocation2 + $0x90]]
    %s186 = sld [smem:[#allocation2 + $0x91]]
    %s187 = sld [smem:[#allocation2 + $0x92]]
    %s188 = sld [smem:[#allocation2 + $0x93]]
    %s189 = sld [smem:[#allocation2 + $0x94]]
    %s190 = sld [smem:[#allocation2 + $0x95]]
    %s191 = sld [smem:[#allocation2 + $0x96]]
    %s192 = sld [smem:[#allocation2 + $0x97]]
    %s193 = sld [smem:[#allocation2 + $0x98]]
    %s194 = sld [smem:[#allocation2 + $0x99]]
    %s195 = sld [smem:[#allocation2 + $0x9a]]
    %s196 = sld [smem:[#allocation2 + $0x9b]]
    %s197 = sld [smem:[#allocation2 + $0x9c]]
    %s198 = sld [smem:[#allocation2 + $0x9d]]
    %s199 = sld [smem:[#allocation2 + $0x9e]]
    %s200 = sld [smem:[#allocation2 + $0x9f]]
    %s201 = sld [smem:[#allocation2 + $0xa0]]
    %s202 = sld [smem:[#allocation2 + $0xa1]]
    %s203 = sld [smem:[#allocation2 + $0xa2]]
    %s204 = sld [smem:[#allocation2 + $0xa3]]
    %s205 = sld [smem:[#allocation2 + $0xa4]]
    %s206 = sld [smem:[#allocation2 + $0xa5]]
    %s207 = sld [smem:[#allocation2 + $0xa6]]
    %s208 = sld [smem:[#allocation2 + $0xa7]]
    %s209 = sld [smem:[#allocation2 + $0xa8]]
    %s210 = sld [smem:[#allocation2 + $0xa9]]
    %s211 = sld [smem:[#allocation2 + $0xaa]]
    %s212 = sld [smem:[#allocation2 + $0xab]]
    %s213 = sld [smem:[#allocation2 + $0xac]]
    %s214 = sld [smem:[#allocation2 + $0xad]]
    %s215 = sld [smem:[#allocation2 + $0xae]]
    %s216 = sld [smem:[#allocation2 + $0xaf]]
    %s217 = sld [smem:[#allocation2 + $0xb0]]
    %s218 = sld [smem:[#allocation2 + $0xb1]]
    %s219 = sld [smem:[#allocation2 + $0xb2]]
    %s220 = sld [smem:[#allocation2 + $0xb3]]
    %s221 = sld [smem:[#allocation2 + $0xb4]]
    %s222 = sld [smem:[#allocation2 + $0xb5]]
    %s223 = sld [smem:[#allocation2 + $0xb6]]
    %s224 = sld [smem:[#allocation2 + $0xb7]]
    %s225 = sld [smem:[#allocation2 + $0xb8]]
    %s226 = sld [smem:[#allocation2 + $0xb9]]
    %s227 = sld [smem:[#allocation2 + $0xba]]
    %s228 = sld [smem:[#allocation2 + $0xbb]]
    %s229 = sld [smem:[#allocation2 + $0xbc]]
    %s230 = sld [smem:[#allocation2 + $0xbd]]
    %s231 = sld [smem:[#allocation2 + $0xbe]]
    %s232 = sld [smem:[#allocation2 + $0xbf]]
    %s233 = sld [smem:[#allocation2 + $0xc0]]
    %s234 = sld [smem:[#allocation2 + $0xc1]]
    %s235 = sld [smem:[#allocation2 + $0xc2]]
    %s236 = sld [smem:[#allocation2 + $0xc3]]
    %s237 = sld [smem:[#allocation2 + $0xc4]]
    %s238 = sld [smem:[#allocation2 + $0xc5]]
    %s239 = sld [smem:[#allocation2 + $0xc6]]
    %s240 = sld [smem:[#allocation2 + $0xc7]]
    %s241 = sld [smem:[#allocation2 + $0xc8]]
    %s242 = sld [smem:[#allocation2 + $0xc9]]
    %s243 = sld [smem:[#allocation2 + $0xca]]
    %s244 = sld [smem:[#allocation2 + $0xcb]]
    %s245 = sld [smem:[#allocation2 + $0xcc]]
    %s246 = sld [smem:[#allocation2 + $0xcd]]
    %s247 = sld [smem:[#allocation2 + $0xce]]
    %s248 = sld [smem:[#allocation2 + $0xcf]]
    %s249 = sld [smem:[#allocation2 + $0xd0]]
    %s250 = sld [smem:[#allocation2 + $0xd1]]
    %s251 = sld [smem:[#allocation2 + $0xd2]]
    %s252 = sld [smem:[#allocation2 + $0xd3]]
    %s253 = sld [smem:[#allocation2 + $0xd4]]
    %s254 = sld [smem:[#allocation2 + $0xd5]]
    %s255 = sld [smem:[#allocation2 + $0xd6]]
    %s256 = sld [smem:[#allocation2 + $0xd7]]
    %s257 = sld [smem:[#allocation2 + $0xd8]]
    %s258 = sld [smem:[#allocation2 + $0xd9]]
    %s259 = sld [smem:[#allocation2 + $0xda]]
    %s260 = sld [smem:[#allocation2 + $0xdb]]
    %s261 = sld [smem:[#allocation2 + $0xdc]]
    %s262 = sld [smem:[#allocation2 + $0xdd]]
    %s263 = sld [smem:[#allocation2 + $0xde]]
    %s264 = sld [smem:[#allocation2 + $0xdf]]
    %s265 = sld [smem:[#allocation2 + $0xe0]]
    %s266 = sld [smem:[#allocation2 + $0xe1]]
    %s267 = sld [smem:[#allocation2 + $0xe2]]
    %s268 = sld [smem:[#allocation2 + $0xe3]]
    %s269 = sld [smem:[#allocation2 + $0xe4]]
    %v270 = vld [vmem:[#allocation6] sm:$0xff]
    %s271 = sadd.s32 0, 8
    %s272 = scalar_lea.vmem [#allocation6], %s271
    %v273 = vld [vmem:[%s272] sm:$0xff]
    %v274 = vstv %s41
    %v275 = vmul.f32 %v270, %v274
    %v276 = vstv %s57
    %v277 = vmul.f32 %v273, %v276
    %v278 = vadd.f32 %v275, %v277
    %v279 = vstv %s73
    %v280 = vadd.f32 %v278, %v279
    %v281 = vmax.f32 %v280, 0.0
    %v282 = vstv %s42
    %v283 = vmul.f32 %v270, %v282
    %v284 = vstv %s58
    %v285 = vmul.f32 %v273, %v284
    %v286 = vadd.f32 %v283, %v285
    %v287 = vstv %s74
    %v288 = vadd.f32 %v286, %v287
    %v289 = vmax.f32 %v288, 0.0
    %v290 = vstv %s43
    %v291 = vmul.f32 %v270, %v290
    %v292 = vstv %s59
    %v293 = vmul.f32 %v273, %v292
    %v294 = vadd.f32 %v291, %v293
    %v295 = vstv %s75
    %v296 = vadd.f32 %v294, %v295
    %v297 = vmax.f32 %v296, 0.0
    %v298 = vstv %s44
    %v299 = vmul.f32 %v270, %v298
    %v300 = vstv %s60
    %v301 = vmul.f32 %v273, %v300
    %v302 = vadd.f32 %v299, %v301
    %v303 = vstv %s76
    %v304 = vadd.f32 %v302, %v303
    %v305 = vmax.f32 %v304, 0.0
    %v306 = vstv %s45
    %v307 = vmul.f32 %v270, %v306
    %v308 = vstv %s61
    %v309 = vmul.f32 %v273, %v308
    %v310 = vadd.f32 %v307, %v309
    %v311 = vstv %s77
    %v312 = vadd.f32 %v310, %v311
    %v313 = vmax.f32 %v312, 0.0
    %v314 = vstv %s46
    %v315 = vmul.f32 %v270, %v314
    %v316 = vstv %s62
    %v317 = vmul.f32 %v273, %v316
    %v318 = vadd.f32 %v315, %v317
    %v319 = vstv %s78
    %v320 = vadd.f32 %v318, %v319
    %v321 = vmax.f32 %v320, 0.0
    %v322 = vstv %s47
    %v323 = vmul.f32 %v270, %v322
    %v324 = vstv %s63
    %v325 = vmul.f32 %v273, %v324
    %v326 = vadd.f32 %v323, %v325
    %v327 = vstv %s79
    %v328 = vadd.f32 %v326, %v327
    %v329 = vmax.f32 %v328, 0.0
    %v330 = vstv %s48
    %v331 = vmul.f32 %v270, %v330
    %v332 = vstv %s64
    %v333 = vmul.f32 %v273, %v332
    %v334 = vadd.f32 %v331, %v333
    %v335 = vstv %s80
    %v336 = vadd.f32 %v334, %v335
    %v337 = vmax.f32 %v336, 0.0
    %v338 = vstv %s49
    %v339 = vmul.f32 %v270, %v338
    %v340 = vstv %s65
    %v341 = vmul.f32 %v273, %v340
    %v342 = vadd.f32 %v339, %v341
    %v343 = vstv %s81
    %v344 = vadd.f32 %v342, %v343
    %v345 = vmax.f32 %v344, 0.0
    %v346 = vstv %s50
    %v347 = vmul.f32 %v270, %v346
    %v348 = vstv %s66
    %v349 = vmul.f32 %v273, %v348
    %v350 = vadd.f32 %v347, %v349
    %v351 = vstv %s82
    %v352 = vadd.f32 %v350, %v351
    %v353 = vmax.f32 %v352, 0.0
    %v354 = vstv %s51
    %v355 = vmul.f32 %v270, %v354
    %v356 = vstv %s67
    %v357 = vmul.f32 %v273, %v356
    %v358 = vadd.f32 %v355, %v357
    %v359 = vstv %s83
    %v360 = vadd.f32 %v358, %v359
    %v361 = vmax.f32 %v360, 0.0
    %v362 = vstv %s52
    %v363 = vmul.f32 %v270, %v362
    %v364 = vstv %s68
    %v365 = vmul.f32 %v273, %v364
    %v366 = vadd.f32 %v363, %v365
    %v367 = vstv %s84
    %v368 = vadd.f32 %v366, %v367
    %v369 = vmax.f32 %v368, 0.0
    %v370 = vstv %s53
    %v371 = vmul.f32 %v270, %v370
    %v372 = vstv %s69
    %v373 = vmul.f32 %v273, %v372
    %v374 = vadd.f32 %v371, %v373
    %v375 = vstv %s85
    %v376 = vadd.f32 %v374, %v375
    %v377 = vmax.f32 %v376, 0.0
    %v378 = vstv %s54
    %v379 = vmul.f32 %v270, %v378
    %v380 = vstv %s70
    %v381 = vmul.f32 %v273, %v380
    %v382 = vadd.f32 %v379, %v381
    %v383 = vstv %s86
    %v384 = vadd.f32 %v382, %v383
    %v385 = vmax.f32 %v384, 0.0
    %v386 = vstv %s55
    %v387 = vmul.f32 %v270, %v386
    %v388 = vstv %s71
    %v389 = vmul.f32 %v273, %v388
    %v390 = vadd.f32 %v387, %v389
    %v391 = vstv %s87
    %v392 = vadd.f32 %v390, %v391
    %v393 = vmax.f32 %v392, 0.0
    %v394 = vstv %s56
    %v395 = vmul.f32 %v270, %v394
    %v396 = vstv %s72
    %v397 = vmul.f32 %v273, %v396
    %v398 = vadd.f32 %v395, %v397
    %v399 = vstv %s88
    %v400 = vadd.f32 %v398, %v399
    %v401 = vmax.f32 %v400, 0.0
    %v402 = vstv %s89
    %v403 = vmul.f32 %v281, %v402
    %v404 = vstv %s99
    %v405 = vmul.f32 %v289, %v404
    %v406 = vadd.f32 %v403, %v405
    %v407 = vstv %s109
    %v408 = vmul.f32 %v297, %v407
    %v409 = vadd.f32 %v406, %v408
    %v410 = vstv %s119
    %v411 = vmul.f32 %v305, %v410
    %v412 = vadd.f32 %v409, %v411
    %v413 = vstv %s129
    %v414 = vmul.f32 %v313, %v413
    %v415 = vadd.f32 %v412, %v414
    %v416 = vstv %s139
    %v417 = vmul.f32 %v321, %v416
    %v418 = vadd.f32 %v415, %v417
    %v419 = vstv %s149
    %v420 = vmul.f32 %v329, %v419
    %v421 = vadd.f32 %v418, %v420
    %v422 = vstv %s159
    %v423 = vmul.f32 %v337, %v422
    %v424 = vadd.f32 %v421, %v423
    %v425 = vstv %s169
    %v426 = vmul.f32 %v345, %v425
    %v427 = vadd.f32 %v424, %v426
    %v428 = vstv %s179
    %v429 = vmul.f32 %v353, %v428
    %v430 = vadd.f32 %v427, %v429
    %v431 = vstv %s189
    %v432 = vmul.f32 %v361, %v431
    %v433 = vadd.f32 %v430, %v432
    %v434 = vstv %s199
    %v435 = vmul.f32 %v369, %v434
    %v436 = vadd.f32 %v433, %v435
    %v437 = vstv %s209
    %v438 = vmul.f32 %v377, %v437
    %v439 = vadd.f32 %v436, %v438
    %v440 = vstv %s219
    %v441 = vmul.f32 %v385, %v440
    %v442 = vadd.f32 %v439, %v441
    %v443 = vstv %s229
    %v444 = vmul.f32 %v393, %v443
    %v445 = vadd.f32 %v442, %v444
    %v446 = vstv %s239
    %v447 = vmul.f32 %v401, %v446
    %v448 = vadd.f32 %v445, %v447
    %v449 = vstv %s249
    %v450 = vadd.f32 %v448, %v449
    %v451 = vmax.f32 %v450, 0.0
    %v452 = vstv %s90
    %v453 = vmul.f32 %v281, %v452
    %v454 = vstv %s100
    %v455 = vmul.f32 %v289, %v454
    %v456 = vadd.f32 %v453, %v455
    %v457 = vstv %s110
    %v458 = vmul.f32 %v297, %v457
    %v459 = vadd.f32 %v456, %v458
    %v460 = vstv %s120
    %v461 = vmul.f32 %v305, %v460
    %v462 = vadd.f32 %v459, %v461
    %v463 = vstv %s130
    %v464 = vmul.f32 %v313, %v463
    %v465 = vadd.f32 %v462, %v464
    %v466 = vstv %s140
    %v467 = vmul.f32 %v321, %v466
    %v468 = vadd.f32 %v465, %v467
    %v469 = vstv %s150
    %v470 = vmul.f32 %v329, %v469
    %v471 = vadd.f32 %v468, %v470
    %v472 = vstv %s160
    %v473 = vmul.f32 %v337, %v472
    %v474 = vadd.f32 %v471, %v473
    %v475 = vstv %s170
    %v476 = vmul.f32 %v345, %v475
    %v477 = vadd.f32 %v474, %v476
    %v478 = vstv %s180
    %v479 = vmul.f32 %v353, %v478
    %v480 = vadd.f32 %v477, %v479
    %v481 = vstv %s190
    %v482 = vmul.f32 %v361, %v481
    %v483 = vadd.f32 %v480, %v482
    %v484 = vstv %s200
    %v485 = vmul.f32 %v369, %v484
    %v486 = vadd.f32 %v483, %v485
    %v487 = vstv %s210
    %v488 = vmul.f32 %v377, %v487
    %v489 = vadd.f32 %v486, %v488
    %v490 = vstv %s220
    %v491 = vmul.f32 %v385, %v490
    %v492 = vadd.f32 %v489, %v491
    %v493 = vstv %s230
    %v494 = vmul.f32 %v393, %v493
    %v495 = vadd.f32 %v492, %v494
    %v496 = vstv %s240
    %v497 = vmul.f32 %v401, %v496
    %v498 = vadd.f32 %v495, %v497
    %v499 = vstv %s250
    %v500 = vadd.f32 %v498, %v499
    %v501 = vmax.f32 %v500, 0.0
    %v502 = vstv %s91
    %v503 = vmul.f32 %v281, %v502
    %v504 = vstv %s101
    %v505 = vmul.f32 %v289, %v504
    %v506 = vadd.f32 %v503, %v505
    %v507 = vstv %s111
    %v508 = vmul.f32 %v297, %v507
    %v509 = vadd.f32 %v506, %v508
    %v510 = vstv %s121
    %v511 = vmul.f32 %v305, %v510
    %v512 = vadd.f32 %v509, %v511
    %v513 = vstv %s131
    %v514 = vmul.f32 %v313, %v513
    %v515 = vadd.f32 %v512, %v514
    %v516 = vstv %s141
    %v517 = vmul.f32 %v321, %v516
    %v518 = vadd.f32 %v515, %v517
    %v519 = vstv %s151
    %v520 = vmul.f32 %v329, %v519
    %v521 = vadd.f32 %v518, %v520
    %v522 = vstv %s161
    %v523 = vmul.f32 %v337, %v522
    %v524 = vadd.f32 %v521, %v523
    %v525 = vstv %s171
    %v526 = vmul.f32 %v345, %v525
    %v527 = vadd.f32 %v524, %v526
    %v528 = vstv %s181
    %v529 = vmul.f32 %v353, %v528
    %v530 = vadd.f32 %v527, %v529
    %v531 = vstv %s191
    %v532 = vmul.f32 %v361, %v531
    %v533 = vadd.f32 %v530, %v532
    %v534 = vstv %s201
    %v535 = vmul.f32 %v369, %v534
    %v536 = vadd.f32 %v533, %v535
    %v537 = vstv %s211
    %v538 = vmul.f32 %v377, %v537
    %v539 = vadd.f32 %v536, %v538
    %v540 = vstv %s221
    %v541 = vmul.f32 %v385, %v540
    %v542 = vadd.f32 %v539, %v541
    %v543 = vstv %s231
    %v544 = vmul.f32 %v393, %v543
    %v545 = vadd.f32 %v542, %v544
    %v546 = vstv %s241
    %v547 = vmul.f32 %v401, %v546
    %v548 = vadd.f32 %v545, %v547
    %v549 = vstv %s251
    %v550 = vadd.f32 %v548, %v549
    %v551 = vmax.f32 %v550, 0.0
    %v552 = vstv %s92
    %v553 = vmul.f32 %v281, %v552
    %v554 = vstv %s102
    %v555 = vmul.f32 %v289, %v554
    %v556 = vadd.f32 %v553, %v555
    %v557 = vstv %s112
    %v558 = vmul.f32 %v297, %v557
    %v559 = vadd.f32 %v556, %v558
    %v560 = vstv %s122
    %v561 = vmul.f32 %v305, %v560
    %v562 = vadd.f32 %v559, %v561
    %v563 = vstv %s132
    %v564 = vmul.f32 %v313, %v563
    %v565 = vadd.f32 %v562, %v564
    %v566 = vstv %s142
    %v567 = vmul.f32 %v321, %v566
    %v568 = vadd.f32 %v565, %v567
    %v569 = vstv %s152
    %v570 = vmul.f32 %v329, %v569
    %v571 = vadd.f32 %v568, %v570
    %v572 = vstv %s162
    %v573 = vmul.f32 %v337, %v572
    %v574 = vadd.f32 %v571, %v573
    %v575 = vstv %s172
    %v576 = vmul.f32 %v345, %v575
    %v577 = vadd.f32 %v574, %v576
    %v578 = vstv %s182
    %v579 = vmul.f32 %v353, %v578
    %v580 = vadd.f32 %v577, %v579
    %v581 = vstv %s192
    %v582 = vmul.f32 %v361, %v581
    %v583 = vadd.f32 %v580, %v582
    %v584 = vstv %s202
    %v585 = vmul.f32 %v369, %v584
    %v586 = vadd.f32 %v583, %v585
    %v587 = vstv %s212
    %v588 = vmul.f32 %v377, %v587
    %v589 = vadd.f32 %v586, %v588
    %v590 = vstv %s222
    %v591 = vmul.f32 %v385, %v590
    %v592 = vadd.f32 %v589, %v591
    %v593 = vstv %s232
    %v594 = vmul.f32 %v393, %v593
    %v595 = vadd.f32 %v592, %v594
    %v596 = vstv %s242
    %v597 = vmul.f32 %v401, %v596
    %v598 = vadd.f32 %v595, %v597
    %v599 = vstv %s252
    %v600 = vadd.f32 %v598, %v599
    %v601 = vmax.f32 %v600, 0.0
    %v602 = vstv %s93
    %v603 = vmul.f32 %v281, %v602
    %v604 = vstv %s103
    %v605 = vmul.f32 %v289, %v604
    %v606 = vadd.f32 %v603, %v605
    %v607 = vstv %s113
    %v608 = vmul.f32 %v297, %v607
    %v609 = vadd.f32 %v606, %v608
    %v610 = vstv %s123
    %v611 = vmul.f32 %v305, %v610
    %v612 = vadd.f32 %v609, %v611
    %v613 = vstv %s133
    %v614 = vmul.f32 %v313, %v613
    %v615 = vadd.f32 %v612, %v614
    %v616 = vstv %s143
    %v617 = vmul.f32 %v321, %v616
    %v618 = vadd.f32 %v615, %v617
    %v619 = vstv %s153
    %v620 = vmul.f32 %v329, %v619
    %v621 = vadd.f32 %v618, %v620
    %v622 = vstv %s163
    %v623 = vmul.f32 %v337, %v622
    %v624 = vadd.f32 %v621, %v623
    %v625 = vstv %s173
    %v626 = vmul.f32 %v345, %v625
    %v627 = vadd.f32 %v624, %v626
    %v628 = vstv %s183
    %v629 = vmul.f32 %v353, %v628
    %v630 = vadd.f32 %v627, %v629
    %v631 = vstv %s193
    %v632 = vmul.f32 %v361, %v631
    %v633 = vadd.f32 %v630, %v632
    %v634 = vstv %s203
    %v635 = vmul.f32 %v369, %v634
    %v636 = vadd.f32 %v633, %v635
    %v637 = vstv %s213
    %v638 = vmul.f32 %v377, %v637
    %v639 = vadd.f32 %v636, %v638
    %v640 = vstv %s223
    %v641 = vmul.f32 %v385, %v640
    %v642 = vadd.f32 %v639, %v641
    %v643 = vstv %s233
    %v644 = vmul.f32 %v393, %v643
    %v645 = vadd.f32 %v642, %v644
    %v646 = vstv %s243
    %v647 = vmul.f32 %v401, %v646
    %v648 = vadd.f32 %v645, %v647
    %v649 = vstv %s253
    %v650 = vadd.f32 %v648, %v649
    %v651 = vmax.f32 %v650, 0.0
    %v652 = vstv %s94
    %v653 = vmul.f32 %v281, %v652
    %v654 = vstv %s104
    %v655 = vmul.f32 %v289, %v654
    %v656 = vadd.f32 %v653, %v655
    %v657 = vstv %s114
    %v658 = vmul.f32 %v297, %v657
    %v659 = vadd.f32 %v656, %v658
    %v660 = vstv %s124
    %v661 = vmul.f32 %v305, %v660
    %v662 = vadd.f32 %v659, %v661
    %v663 = vstv %s134
    %v664 = vmul.f32 %v313, %v663
    %v665 = vadd.f32 %v662, %v664
    %v666 = vstv %s144
    %v667 = vmul.f32 %v321, %v666
    %v668 = vadd.f32 %v665, %v667
    %v669 = vstv %s154
    %v670 = vmul.f32 %v329, %v669
    %v671 = vadd.f32 %v668, %v670
    %v672 = vstv %s164
    %v673 = vmul.f32 %v337, %v672
    %v674 = vadd.f32 %v671, %v673
    %v675 = vstv %s174
    %v676 = vmul.f32 %v345, %v675
    %v677 = vadd.f32 %v674, %v676
    %v678 = vstv %s184
    %v679 = vmul.f32 %v353, %v678
    %v680 = vadd.f32 %v677, %v679
    %v681 = vstv %s194
    %v682 = vmul.f32 %v361, %v681
    %v683 = vadd.f32 %v680, %v682
    %v684 = vstv %s204
    %v685 = vmul.f32 %v369, %v684
    %v686 = vadd.f32 %v683, %v685
    %v687 = vstv %s214
    %v688 = vmul.f32 %v377, %v687
    %v689 = vadd.f32 %v686, %v688
    %v690 = vstv %s224
    %v691 = vmul.f32 %v385, %v690
    %v692 = vadd.f32 %v689, %v691
    %v693 = vstv %s234
    %v694 = vmul.f32 %v393, %v693
    %v695 = vadd.f32 %v692, %v694
    %v696 = vstv %s244
    %v697 = vmul.f32 %v401, %v696
    %v698 = vadd.f32 %v695, %v697
    %v699 = vstv %s254
    %v700 = vadd.f32 %v698, %v699
    %v701 = vmax.f32 %v700, 0.0
    %v702 = vstv %s95
    %v703 = vmul.f32 %v281, %v702
    %v704 = vstv %s105
    %v705 = vmul.f32 %v289, %v704
    %v706 = vadd.f32 %v703, %v705
    %v707 = vstv %s115
    %v708 = vmul.f32 %v297, %v707
    %v709 = vadd.f32 %v706, %v708
    %v710 = vstv %s125
    %v711 = vmul.f32 %v305, %v710
    %v712 = vadd.f32 %v709, %v711
    %v713 = vstv %s135
    %v714 = vmul.f32 %v313, %v713
    %v715 = vadd.f32 %v712, %v714
    %v716 = vstv %s145
    %v717 = vmul.f32 %v321, %v716
    %v718 = vadd.f32 %v715, %v717
    %v719 = vstv %s155
    %v720 = vmul.f32 %v329, %v719
    %v721 = vadd.f32 %v718, %v720
    %v722 = vstv %s165
    %v723 = vmul.f32 %v337, %v722
    %v724 = vadd.f32 %v721, %v723
    %v725 = vstv %s175
    %v726 = vmul.f32 %v345, %v725
    %v727 = vadd.f32 %v724, %v726
    %v728 = vstv %s185
    %v729 = vmul.f32 %v353, %v728
    %v730 = vadd.f32 %v727, %v729
    %v731 = vstv %s195
    %v732 = vmul.f32 %v361, %v731
    %v733 = vadd.f32 %v730, %v732
    %v734 = vstv %s205
    %v735 = vmul.f32 %v369, %v734
    %v736 = vadd.f32 %v733, %v735
    %v737 = vstv %s215
    %v738 = vmul.f32 %v377, %v737
    %v739 = vadd.f32 %v736, %v738
    %v740 = vstv %s225
    %v741 = vmul.f32 %v385, %v740
    %v742 = vadd.f32 %v739, %v741
    %v743 = vstv %s235
    %v744 = vmul.f32 %v393, %v743
    %v745 = vadd.f32 %v742, %v744
    %v746 = vstv %s245
    %v747 = vmul.f32 %v401, %v746
    %v748 = vadd.f32 %v745, %v747
    %v749 = vstv %s255
    %v750 = vadd.f32 %v748, %v749
    %v751 = vmax.f32 %v750, 0.0
    %v752 = vstv %s96
    %v753 = vmul.f32 %v281, %v752
    %v754 = vstv %s106
    %v755 = vmul.f32 %v289, %v754
    %v756 = vadd.f32 %v753, %v755
    %v757 = vstv %s116
    %v758 = vmul.f32 %v297, %v757
    %v759 = vadd.f32 %v756, %v758
    %v760 = vstv %s126
    %v761 = vmul.f32 %v305, %v760
    %v762 = vadd.f32 %v759, %v761
    %v763 = vstv %s136
    %v764 = vmul.f32 %v313, %v763
    %v765 = vadd.f32 %v762, %v764
    %v766 = vstv %s146
    %v767 = vmul.f32 %v321, %v766
    %v768 = vadd.f32 %v765, %v767
    %v769 = vstv %s156
    %v770 = vmul.f32 %v329, %v769
    %v771 = vadd.f32 %v768, %v770
    %v772 = vstv %s166
    %v773 = vmul.f32 %v337, %v772
    %v774 = vadd.f32 %v771, %v773
    %v775 = vstv %s176
    %v776 = vmul.f32 %v345, %v775
    %v777 = vadd.f32 %v774, %v776
    %v778 = vstv %s186
    %v779 = vmul.f32 %v353, %v778
    %v780 = vadd.f32 %v777, %v779
    %v781 = vstv %s196
    %v782 = vmul.f32 %v361, %v781
    %v783 = vadd.f32 %v780, %v782
    %v784 = vstv %s206
    %v785 = vmul.f32 %v369, %v784
    %v786 = vadd.f32 %v783, %v785
    %v787 = vstv %s216
    %v788 = vmul.f32 %v377, %v787
    %v789 = vadd.f32 %v786, %v788
    %v790 = vstv %s226
    %v791 = vmul.f32 %v385, %v790
    %v792 = vadd.f32 %v789, %v791
    %v793 = vstv %s236
    %v794 = vmul.f32 %v393, %v793
    %v795 = vadd.f32 %v792, %v794
    %v796 = vstv %s246
    %v797 = vmul.f32 %v401, %v796
    %v798 = vadd.f32 %v795, %v797
    %v799 = vstv %s256
    %v800 = vadd.f32 %v798, %v799
    %v801 = vmax.f32 %v800, 0.0
    %v802 = vstv %s97
    %v803 = vmul.f32 %v281, %v802
    %v804 = vstv %s107
    %v805 = vmul.f32 %v289, %v804
    %v806 = vadd.f32 %v803, %v805
    %v807 = vstv %s117
    %v808 = vmul.f32 %v297, %v807
    %v809 = vadd.f32 %v806, %v808
    %v810 = vstv %s127
    %v811 = vmul.f32 %v305, %v810
    %v812 = vadd.f32 %v809, %v811
    %v813 = vstv %s137
    %v814 = vmul.f32 %v313, %v813
    %v815 = vadd.f32 %v812, %v814
    %v816 = vstv %s147
    %v817 = vmul.f32 %v321, %v816
    %v818 = vadd.f32 %v815, %v817
    %v819 = vstv %s157
    %v820 = vmul.f32 %v329, %v819
    %v821 = vadd.f32 %v818, %v820
    %v822 = vstv %s167
    %v823 = vmul.f32 %v337, %v822
    %v824 = vadd.f32 %v821, %v823
    %v825 = vstv %s177
    %v826 = vmul.f32 %v345, %v825
    %v827 = vadd.f32 %v824, %v826
    %v828 = vstv %s187
    %v829 = vmul.f32 %v353, %v828
    %v830 = vadd.f32 %v827, %v829
    %v831 = vstv %s197
    %v832 = vmul.f32 %v361, %v831
    %v833 = vadd.f32 %v830, %v832
    %v834 = vstv %s207
    %v835 = vmul.f32 %v369, %v834
    %v836 = vadd.f32 %v833, %v835
    %v837 = vstv %s217
    %v838 = vmul.f32 %v377, %v837
    %v839 = vadd.f32 %v836, %v838
    %v840 = vstv %s227
    %v841 = vmul.f32 %v385, %v840
    %v842 = vadd.f32 %v839, %v841
    %v843 = vstv %s237
    %v844 = vmul.f32 %v393, %v843
    %v845 = vadd.f32 %v842, %v844
    %v846 = vstv %s247
    %v847 = vmul.f32 %v401, %v846
    %v848 = vadd.f32 %v845, %v847
    %v849 = vstv %s257
    %v850 = vadd.f32 %v848, %v849
    %v851 = vmax.f32 %v850, 0.0
    %v852 = vstv %s98
    %v853 = vmul.f32 %v281, %v852
    %v854 = vstv %s108
    %v855 = vmul.f32 %v289, %v854
    %v856 = vadd.f32 %v853, %v855
    %v857 = vstv %s118
    %v858 = vmul.f32 %v297, %v857
    %v859 = vadd.f32 %v856, %v858
    %v860 = vstv %s128
    %v861 = vmul.f32 %v305, %v860
    %v862 = vadd.f32 %v859, %v861
    %v863 = vstv %s138
    %v864 = vmul.f32 %v313, %v863
    %v865 = vadd.f32 %v862, %v864
    %v866 = vstv %s148
    %v867 = vmul.f32 %v321, %v866
    %v868 = vadd.f32 %v865, %v867
    %v869 = vstv %s158
    %v870 = vmul.f32 %v329, %v869
    %v871 = vadd.f32 %v868, %v870
    %v872 = vstv %s168
    %v873 = vmul.f32 %v337, %v872
    %v874 = vadd.f32 %v871, %v873
    %v875 = vstv %s178
    %v876 = vmul.f32 %v345, %v875
    %v877 = vadd.f32 %v874, %v876
    %v878 = vstv %s188
    %v879 = vmul.f32 %v353, %v878
    %v880 = vadd.f32 %v877, %v879
    %v881 = vstv %s198
    %v882 = vmul.f32 %v361, %v881
    %v883 = vadd.f32 %v880, %v882
    %v884 = vstv %s208
    %v885 = vmul.f32 %v369, %v884
    %v886 = vadd.f32 %v883, %v885
    %v887 = vstv %s218
    %v888 = vmul.f32 %v377, %v887
    %v889 = vadd.f32 %v886, %v888
    %v890 = vstv %s228
    %v891 = vmul.f32 %v385, %v890
    %v892 = vadd.f32 %v889, %v891
    %v893 = vstv %s238
    %v894 = vmul.f32 %v393, %v893
    %v895 = vadd.f32 %v892, %v894
    %v896 = vstv %s248
    %v897 = vmul.f32 %v401, %v896
    %v898 = vadd.f32 %v895, %v897
    %v899 = vstv %s258
    %v900 = vadd.f32 %v898, %v899
    %v901 = vmax.f32 %v900, 0.0
    %v902 = vstv %s259
    %v903 = vmul.f32 %v451, %v902
    %v904 = vstv %s260
    %v905 = vmul.f32 %v501, %v904
    %v906 = vadd.f32 %v903, %v905
    %v907 = vstv %s261
    %v908 = vmul.f32 %v551, %v907
    %v909 = vadd.f32 %v906, %v908
    %v910 = vstv %s262
    %v911 = vmul.f32 %v601, %v910
    %v912 = vadd.f32 %v909, %v911
    %v913 = vstv %s263
    %v914 = vmul.f32 %v651, %v913
    %v915 = vadd.f32 %v912, %v914
    %v916 = vstv %s264
    %v917 = vmul.f32 %v701, %v916
    %v918 = vadd.f32 %v915, %v917
    %v919 = vstv %s265
    %v920 = vmul.f32 %v751, %v919
    %v921 = vadd.f32 %v918, %v920
    %v922 = vstv %s266
    %v923 = vmul.f32 %v801, %v922
    %v924 = vadd.f32 %v921, %v923
    %v925 = vstv %s267
    %v926 = vmul.f32 %v851, %v925
    %v927 = vadd.f32 %v924, %v926
    %v928 = vstv %s268
    %v929 = vmul.f32 %v901, %v928
    %v930 = vadd.f32 %v927, %v929
    %v931 = vstv %s269
    %v932 = vadd.f32 %v930, %v931
    %933 = vst [vmem:[#allocation7] sm:$0xff] %v932
    // Predicated region
    $region18: #{tpu_custom_call.1} parent=1 // pred_check
      _
    $region19: #{tpu_custom_call.1} parent=1 // pred_check_branch
      %935 = sbr.rel (0) target = $region21
    $region20: #{tpu_custom_call.1} parent=1 // pred_region
      %937 = vsyncadd [#allocation4], 0
      %s939 = sshll.u32 [#allocation7], 4
      %s940 = int_to_ptr.vmem [resolvable:$true] %s939
      %s941 = sshll.u32 %s2, 4
      %s942 = int_to_ptr.hbm [resolvable:$true] %s941
      %944 = dma.vmem_to_hbm [thread:$0]  %s940, 128, %s942, [#allocation4]
    $region21: #{tpu_custom_call.1} parent=1 // pred_fallthru
      _
    // Predicated region
    $region22: #{tpu_custom_call.1} parent=1 // pred_check
      _
    $region23: #{tpu_custom_call.1} parent=1 // pred_check_branch
      %946 = sbr.rel (0) target = $region25
    $region24: #{tpu_custom_call.1} parent=1 // pred_region
      %948 = dma.done [#allocation4], 128
    $region25: #{tpu_custom_call.1} parent=1 // pred_fallthru
      _
    %949 = vsyncpa [#allocation3], 1
    %950 = vsyncpa [#allocation4], 1
    %951 = vsyncpa [#allocation5], 1

</llo_original>
